<compile_context>
chip_gen: v5e
topology: v5e:2x2
jax: 0.10.0
libtpu: 0.0.40
codegen_flags: <defaults>
</compile_context>

<pallas_src>
import functools

import jax
import jax.numpy as jnp
from jax import lax
from jax.experimental import pallas as pl
from jax.experimental.pallas import tpu as pltpu

BN_EPS = 1e-5     # HPS['batchnorm_kwargs']['eps']
COS_EPS = 1e-8    # F.cosine_similarity default eps

# small, module-consistent sizes (scaled down from mlp_hidden=4096 / proj=256)
BATCH = 8
C, H, W = 4, 16, 16
IN_FLAT = C * H * W          # 1024
BACKBONE_DIM = 128           # backbone.output_dim (lane-dense stand-in)
MLP_HIDDEN = 256             # HPS['mlp_hidden_size'] (scaled)
PROJ = 128                   # HPS['projection_size'] (scaled)

# packed bias/gamma/beta table layout ([VEC_ROWS, VEC_W] f32)
VEC_W = 2 * MLP_HIDDEN       # 512 (max packed row width)
VEC_ROWS = 16                # 9 used rows, padded to a full sublane group
(ROW_BB_B, ROW_P1_B, ROW_P1_G, ROW_P1_BE, ROW_P2_B,
 ROW_Q1_B, ROW_Q1_G, ROW_Q1_BE, ROW_Q2_B) = range(9)


# ----------------------------- fused Pallas kernel -----------------------------

def byol_fused_kernel(x1_ref, x2_ref,                       # [B, IN_FLAT] each
                      wbb_ref,                              # [IN_FLAT, 2*BACKBONE_DIM] bf16
                      wp1_ref,                              # [2*BACKBONE_DIM, 2*MLP_HIDDEN] bf16 (block-diag)
                      wp2_ref,                              # [2*MLP_HIDDEN, 2*PROJ]        bf16 (block-diag)
                      wq1_ref,                              # [PROJ, MLP_HIDDEN]            bf16
                      wq2_ref,                              # [MLP_HIDDEN, PROJ]            bf16
                      vec_ref,                              # [VEC_ROWS, VEC_W] f32 packed vectors
                      loss_ref,                             # SMEM (1, 1) f32
                      *, batch):
    def vec(row, width):
        # (1, width) f32 slab; broadcasts over the 2B rows.  Static slice.
        return vec_ref[row:row + 1, 0:width]

    def matmul(a, w_ref):
        # bf16 operands (weights pre-cast at rest), f32 accumulation.
        return jnp.dot(a.astype(jnp.bfloat16), w_ref[...],
                       preferred_element_type=jnp.float32)

    def bn_relu(h, g, be):
        # Training-mode BatchNorm1d with statistics computed PER VIEW (rows
        # [0:B) vs [B:2B)) to match two separate encoder calls in the torch
        # reference.  Masked reductions: no sublane slice/concat copies.
        rows = lax.broadcasted_iota(jnp.int32, h.shape, 0)
        in_v1 = rows < batch
        h1 = jnp.where(in_v1, h, 0.0)
        h2 = h - h1
        inv_b = 1.0 / batch
        mu1 = jnp.sum(h1, axis=0, keepdims=True) * inv_b
        mu2 = jnp.sum(h2, axis=0, keepdims=True) * inv_b
        ms1 = jnp.sum(h1 * h1, axis=0, keepdims=True) * inv_b
        ms2 = jnp.sum(h2 * h2, axis=0, keepdims=True) * inv_b
        var1 = jnp.maximum(ms1 - mu1 * mu1, 0.0)   # biased var, like torch BN
        var2 = jnp.maximum(ms2 - mu2 * mu2, 0.0)
        mu = jnp.where(in_v1, mu1, mu2)
        var = jnp.where(in_v1, var1, var2)
        hn = (h - mu) * lax.rsqrt(var + BN_EPS)
        return jnp.maximum(hn * g + be, 0.0)

    # stack the two views inside VMEM (rows [0:B) = view 1, [B:2B) = view 2)
    x = jnp.concatenate([x1_ref[...], x2_ref[...]], axis=0)           # [2B, IN_FLAT] f32

    # ---- backbone: online | target fused along N (shared input x) ----
    feat = matmul(x, wbb_ref) + vec(ROW_BB_B, 2 * BACKBONE_DIM)       # [2B, 256] = [feat_o | feat_t]

    # ---- projector layer1 (block-diagonal online/target) + BN + ReLU ----
    h = matmul(feat, wp1_ref) + vec(ROW_P1_B, 2 * MLP_HIDDEN)         # [2B, 512] = [h_o | h_t]
    h = bn_relu(h, vec(ROW_P1_G, 2 * MLP_HIDDEN), vec(ROW_P1_BE, 2 * MLP_HIDDEN))

    # ---- projector layer2 (block-diagonal) -> [z_online | z_target] ----
    z = matmul(h, wp2_ref) + vec(ROW_P2_B, 2 * PROJ)                  # [2B, 256]
    z_o = z[:, 0:PROJ]                                                # online projections
    z_t = z[:, PROJ:2 * PROJ]                                         # target projections (no_grad branch)

    # ---- online predictor on z_o ----
    hq = matmul(z_o, wq1_ref) + vec(ROW_Q1_B, MLP_HIDDEN)             # [2B, 256]
    hq = bn_relu(hq, vec(ROW_Q1_G, MLP_HIDDEN), vec(ROW_Q1_BE, MLP_HIDDEN))
    p = matmul(hq, wq2_ref) + vec(ROW_Q2_B, PROJ)                     # [2B, 128] = [p1_o ; p2_o]

    # ---- loss: D(p1, z2_t)/2 + D(p2, z1_t)/2 == -mean(cos) over 2B cross pairs ----
    z_sw = pltpu.roll(z_t, shift=batch, axis=0)                       # [z2_t ; z1_t] (XLU sublane rotate)
    num = jnp.sum(p * z_sw, axis=-1, keepdims=True)                   # [2B, 1]
    pn = jnp.sqrt(jnp.sum(p * p, axis=-1, keepdims=True))
    zn = jnp.sqrt(jnp.sum(z_sw * z_sw, axis=-1, keepdims=True))
    cos = num / (jnp.maximum(pn, COS_EPS) * jnp.maximum(zn, COS_EPS)) # exact division (parity)
    loss_ref[0, 0] = -jnp.mean(cos)


# ----------------------------- wrapper -----------------------------

@jax.jit
def byol_forward(x1, x2, packed):
    B = x1.shape[0]
    x1f = x1.reshape(B, -1)          # torch.flatten(x, 1): contiguous, free
    x2f = x2.reshape(B, -1)
    args = (x1f, x2f,
            packed["w_bb"], packed["w_p1"], packed["w_p2"],
            packed["w_q1"], packed["w_q2"], packed["vecs"])
    vmem = pl.BlockSpec(memory_space=pltpu.MemorySpace.VMEM)
    loss = pl.pallas_call(
        functools.partial(byol_fused_kernel, batch=B),
        out_shape=jax.ShapeDtypeStruct((1, 1), jnp.float32),
        in_specs=[vmem] * len(args),
        out_specs=pl.BlockSpec(memory_space=pltpu.MemorySpace.SMEM),
    )(*args)
    return {"loss": loss[0, 0]}


# ----------------------------- parameter packing -----------------------------

def _block_diag(a, b):
    ka, na = a.shape
    kb, nb = b.shape
    out = jnp.zeros((ka + kb, na + nb), a.dtype)
    out = out.at[:ka, :na].set(a)
    out = out.at[ka:, na:].set(b)
    return out


def pack_params(online_enc, target_enc, predictor):
    """Build fused, MXU-ready (bf16) weights and the packed vector table.

    Done ONCE outside the forward pass so the kernel DMAs bf16 weights at rest.
    """
    op, tp, pr = online_enc["projector"], target_enc["projector"], predictor

    w_bb = jnp.concatenate([online_enc["backbone_w"], target_enc["backbone_w"]],
                           axis=1).astype(jnp.bfloat16)               # [1024, 256]
    w_p1 = _block_diag(op["w1"], tp["w1"]).astype(jnp.bfloat16)       # [256, 512]
    w_p2 = _block_diag(op["w2"], tp["w2"]).astype(jnp.bfloat16)       # [512, 256]
    w_q1 = pr["w1"].astype(jnp.bfloat16)                              # [128, 256]
    w_q2 = pr["w2"].astype(jnp.bfloat16)                              # [256, 128]

    def row(*parts):
        v = jnp.concatenate([p.reshape(-1).astype(jnp.float32) for p in parts])
        return jnp.pad(v, (0, VEC_W - v.shape[0]))

    rows = [
        row(online_enc["backbone_b"], target_enc["backbone_b"]),      # ROW_BB_B
        row(op["b1"], tp["b1"]),                                      # ROW_P1_B
        row(op["gamma"], tp["gamma"]),                                # ROW_P1_G
        row(op["beta"], tp["beta"]),                                  # ROW_P1_BE
        row(op["b2"], tp["b2"]),                                      # ROW_P2_B
        row(pr["b1"]),                                                # ROW_Q1_B
        row(pr["gamma"]),                                             # ROW_Q1_G
        row(pr["beta"]),                                              # ROW_Q1_BE
        row(pr["b2"]),                                                # ROW_Q2_B
    ]
    rows += [jnp.zeros((VEC_W,), jnp.float32)] * (VEC_ROWS - len(rows))
    vecs = jnp.stack(rows).astype(jnp.float32)                        # [16, 512]

    return {"w_bb": w_bb, "w_p1": w_p1, "w_p2": w_p2,
            "w_q1": w_q1, "w_q2": w_q2, "vecs": vecs}


# ----------------------------- parameter init -----------------------------

def init_linear(key, fan_in, fan_out):
    # like torch nn.Linear default: U(-1/sqrt(fan_in), 1/sqrt(fan_in))
    kw, kb = jax.random.split(key)
    bound = 1.0 / float(fan_in) ** 0.5
    w = jax.random.uniform(kw, (fan_in, fan_out), jnp.float32, -bound, bound)
    b = jax.random.uniform(kb, (1, fan_out), jnp.float32, -bound, bound)
    return w, b


def init_mlp(key, in_dim, hidden, out_dim):
    k1, k2 = jax.random.split(key)
    w1, b1 = init_linear(k1, in_dim, hidden)
    w2, b2 = init_linear(k2, hidden, out_dim)
    return {
        "w1": w1, "b1": b1,
        "gamma": jnp.ones((1, hidden), jnp.float32),
        "beta": jnp.zeros((1, hidden), jnp.float32),
        "w2": w2, "b2": b2,
    }


def init_encoder(key):
    kb, kp = jax.random.split(key)
    wb, bb = init_linear(kb, IN_FLAT, BACKBONE_DIM)
    return {"backbone_w": wb, "backbone_b": bb,
            "projector": init_mlp(kp, BACKBONE_DIM, MLP_HIDDEN, PROJ)}


# TODO(synk): update_moving_average / target_ema are training-time EMA updates,
# not part of the forward pass, so they are not implemented as kernels.

if __name__ == "__main__":
    key = jax.random.PRNGKey(0)
    k_x1, k_x2, k_enc, k_pred = jax.random.split(key, 4)

    x1 = jax.random.normal(k_x1, (BATCH, C, H, W), jnp.float32)
    x2 = jax.random.normal(k_x2, (BATCH, C, H, W), jnp.float32)

    online_enc = init_encoder(k_enc)
    # target_encoder = copy.deepcopy(online_encoder): identical weights at init
    target_enc = jax.tree_util.tree_map(lambda a: a.copy(), online_enc)
    predictor = init_mlp(k_pred, PROJ, MLP_HIDDEN, PROJ)

    packed = pack_params(online_enc, target_enc, predictor)

    out = byol_forward(x1, x2, packed)
    jax.block_until_ready(out["loss"])
    print("KERNEL_OK")
</pallas_src>

<mosaic_0001>
module attributes {stable_mosaic.version = 11 : i64} {
  func.func @byol_fused_kernel(%arg0: memref<8x1024xf32, #tpu.memory_space<vmem>>, %arg1: memref<8x1024xf32, #tpu.memory_space<vmem>>, %arg2: memref<1024x256xbf16, #tpu.memory_space<vmem>>, %arg3: memref<256x512xbf16, #tpu.memory_space<vmem>>, %arg4: memref<512x256xbf16, #tpu.memory_space<vmem>>, %arg5: memref<128x256xbf16, #tpu.memory_space<vmem>>, %arg6: memref<256x128xbf16, #tpu.memory_space<vmem>>, %arg7: memref<16x512xf32, #tpu.memory_space<vmem>>, %arg8: memref<1x1xf32, #tpu.memory_space<smem>>) attributes {dimension_semantics = [], scalar_prefetch = 0 : i64, scratch_operands = 0 : i64, tpu.core_type = #tpu.core_type<tc>} {
    %c0 = arith.constant 0 : index
    %c0_0 = arith.constant 0 : index
    %0 = vector.load %arg0[%c0, %c0_0] : memref<8x1024xf32, #tpu.memory_space<vmem>>, vector<8x1024xf32>
    %c0_1 = arith.constant 0 : index
    %c0_2 = arith.constant 0 : index
    %1 = vector.load %arg1[%c0_1, %c0_2] : memref<8x1024xf32, #tpu.memory_space<vmem>>, vector<8x1024xf32>
    %2 = tpu.concatenate %0, %1 in 0 : vector<8x1024xf32>, vector<8x1024xf32> -> vector<16x1024xf32>
    %3 = arith.truncf %2 : vector<16x1024xf32> to vector<16x1024xbf16>
    %c0_3 = arith.constant 0 : index
    %c0_4 = arith.constant 0 : index
    %4 = vector.load %arg2[%c0_3, %c0_4] : memref<1024x256xbf16, #tpu.memory_space<vmem>>, vector<1024x256xbf16>
    %cst = arith.constant dense<0.000000e+00> : vector<16x256xf32>
    %5 = tpu.matmul %3, %4, %cst {dimension_numbers = #tpu.dot_dimension_numbers<[1], [0], [0], [1], [0, 0, 1, 1], [], []>} : vector<16x1024xbf16>, vector<1024x256xbf16>, vector<16x256xf32> -> vector<16x256xf32>
    %c0_5 = arith.constant 0 : index
    %c0_6 = arith.constant 0 : index
    %6 = vector.load %arg7[%c0_5, %c0_6] : memref<16x512xf32, #tpu.memory_space<vmem>>, vector<1x256xf32>
    %7 = vector.broadcast %6 : vector<1x256xf32> to vector<16x256xf32>
    %8 = arith.addf %5, %7 : vector<16x256xf32>
    %9 = arith.truncf %8 : vector<16x256xf32> to vector<16x256xbf16>
    %c0_7 = arith.constant 0 : index
    %c0_8 = arith.constant 0 : index
    %10 = vector.load %arg3[%c0_7, %c0_8] : memref<256x512xbf16, #tpu.memory_space<vmem>>, vector<256x512xbf16>
    %cst_9 = arith.constant dense<0.000000e+00> : vector<16x512xf32>
    %11 = tpu.matmul %9, %10, %cst_9 {dimension_numbers = #tpu.dot_dimension_numbers<[1], [0], [0], [1], [0, 0, 1, 1], [], []>} : vector<16x256xbf16>, vector<256x512xbf16>, vector<16x512xf32> -> vector<16x512xf32>
    %c1 = arith.constant 1 : index
    %c0_10 = arith.constant 0 : index
    %12 = vector.load %arg7[%c1, %c0_10] : memref<16x512xf32, #tpu.memory_space<vmem>>, vector<1x512xf32>
    %13 = vector.broadcast %12 : vector<1x512xf32> to vector<16x512xf32>
    %14 = arith.addf %11, %13 : vector<16x512xf32>
    %c2 = arith.constant 2 : index
    %c0_11 = arith.constant 0 : index
    %15 = vector.load %arg7[%c2, %c0_11] : memref<16x512xf32, #tpu.memory_space<vmem>>, vector<1x512xf32>
    %c3 = arith.constant 3 : index
    %c0_12 = arith.constant 0 : index
    %16 = vector.load %arg7[%c3, %c0_12] : memref<16x512xf32, #tpu.memory_space<vmem>>, vector<1x512xf32>
    %17 = tpu.iota {dimensions = array<i32: 0>} : vector<16x512xi32>
    %c8_i32 = arith.constant 8 : i32
    %18 = vector.broadcast %c8_i32 : i32 to vector<16x512xi32>
    %19 = arith.cmpi slt, %17, %18 : vector<16x512xi32>
    %cst_13 = arith.constant 0.000000e+00 : f32
    %20 = vector.broadcast %cst_13 : f32 to vector<16x512xf32>
    %21 = arith.select %19, %14, %20 : vector<16x512xi1>, vector<16x512xf32>
    %22 = arith.subf %14, %21 : vector<16x512xf32>
    %cst_14 = arith.constant dense<0.000000e+00> : vector<512xf32>
    %23 = vector.multi_reduction <add>, %21, %cst_14 [0] : vector<16x512xf32> to vector<512xf32>
    %24 = vector.shape_cast %23 : vector<512xf32> to vector<1x512xf32>
    %cst_15 = arith.constant 1.250000e-01 : f32
    %25 = vector.broadcast %cst_15 : f32 to vector<1x512xf32>
    %26 = arith.mulf %24, %25 : vector<1x512xf32>
    %cst_16 = arith.constant dense<0.000000e+00> : vector<512xf32>
    %27 = vector.multi_reduction <add>, %22, %cst_16 [0] : vector<16x512xf32> to vector<512xf32>
    %28 = vector.shape_cast %27 : vector<512xf32> to vector<1x512xf32>
    %cst_17 = arith.constant 1.250000e-01 : f32
    %29 = vector.broadcast %cst_17 : f32 to vector<1x512xf32>
    %30 = arith.mulf %28, %29 : vector<1x512xf32>
    %31 = arith.mulf %21, %21 : vector<16x512xf32>
    %cst_18 = arith.constant dense<0.000000e+00> : vector<512xf32>
    %32 = vector.multi_reduction <add>, %31, %cst_18 [0] : vector<16x512xf32> to vector<512xf32>
    %33 = vector.shape_cast %32 : vector<512xf32> to vector<1x512xf32>
    %cst_19 = arith.constant 1.250000e-01 : f32
    %34 = vector.broadcast %cst_19 : f32 to vector<1x512xf32>
    %35 = arith.mulf %33, %34 : vector<1x512xf32>
    %36 = arith.mulf %22, %22 : vector<16x512xf32>
    %cst_20 = arith.constant dense<0.000000e+00> : vector<512xf32>
    %37 = vector.multi_reduction <add>, %36, %cst_20 [0] : vector<16x512xf32> to vector<512xf32>
    %38 = vector.shape_cast %37 : vector<512xf32> to vector<1x512xf32>
    %cst_21 = arith.constant 1.250000e-01 : f32
    %39 = vector.broadcast %cst_21 : f32 to vector<1x512xf32>
    %40 = arith.mulf %38, %39 : vector<1x512xf32>
    %41 = arith.mulf %26, %26 : vector<1x512xf32>
    %42 = arith.subf %35, %41 : vector<1x512xf32>
    %cst_22 = arith.constant 0.000000e+00 : f32
    %43 = vector.broadcast %cst_22 : f32 to vector<1x512xf32>
    %44 = arith.maximumf %42, %43 : vector<1x512xf32>
    %45 = arith.mulf %30, %30 : vector<1x512xf32>
    %46 = arith.subf %40, %45 : vector<1x512xf32>
    %cst_23 = arith.constant 0.000000e+00 : f32
    %47 = vector.broadcast %cst_23 : f32 to vector<1x512xf32>
    %48 = arith.maximumf %46, %47 : vector<1x512xf32>
    %49 = vector.shape_cast %26 : vector<1x512xf32> to vector<1x512xf32>
    %50 = vector.broadcast %49 : vector<1x512xf32> to vector<16x512xf32>
    %51 = vector.shape_cast %30 : vector<1x512xf32> to vector<1x512xf32>
    %52 = vector.broadcast %51 : vector<1x512xf32> to vector<16x512xf32>
    %53 = arith.select %19, %50, %52 : vector<16x512xi1>, vector<16x512xf32>
    %54 = vector.shape_cast %44 : vector<1x512xf32> to vector<1x512xf32>
    %55 = vector.broadcast %54 : vector<1x512xf32> to vector<16x512xf32>
    %56 = vector.shape_cast %48 : vector<1x512xf32> to vector<1x512xf32>
    %57 = vector.broadcast %56 : vector<1x512xf32> to vector<16x512xf32>
    %58 = arith.select %19, %55, %57 : vector<16x512xi1>, vector<16x512xf32>
    %59 = arith.subf %14, %53 : vector<16x512xf32>
    %cst_24 = arith.constant 9.99999974E-6 : f32
    %60 = vector.broadcast %cst_24 : f32 to vector<16x512xf32>
    %61 = arith.addf %58, %60 : vector<16x512xf32>
    %62 = math.rsqrt %61 : vector<16x512xf32>
    %63 = arith.mulf %59, %62 : vector<16x512xf32>
    %64 = vector.broadcast %15 : vector<1x512xf32> to vector<16x512xf32>
    %65 = arith.mulf %63, %64 : vector<16x512xf32>
    %66 = vector.broadcast %16 : vector<1x512xf32> to vector<16x512xf32>
    %67 = arith.addf %65, %66 : vector<16x512xf32>
    %cst_25 = arith.constant 0.000000e+00 : f32
    %68 = vector.broadcast %cst_25 : f32 to vector<16x512xf32>
    %69 = arith.maximumf %67, %68 : vector<16x512xf32>
    %70 = arith.truncf %69 : vector<16x512xf32> to vector<16x512xbf16>
    %c0_26 = arith.constant 0 : index
    %c0_27 = arith.constant 0 : index
    %71 = vector.load %arg4[%c0_26, %c0_27] : memref<512x256xbf16, #tpu.memory_space<vmem>>, vector<512x256xbf16>
    %cst_28 = arith.constant dense<0.000000e+00> : vector<16x256xf32>
    %72 = tpu.matmul %70, %71, %cst_28 {dimension_numbers = #tpu.dot_dimension_numbers<[1], [0], [0], [1], [0, 0, 1, 1], [], []>} : vector<16x512xbf16>, vector<512x256xbf16>, vector<16x256xf32> -> vector<16x256xf32>
    %c4 = arith.constant 4 : index
    %c0_29 = arith.constant 0 : index
    %73 = vector.load %arg7[%c4, %c0_29] : memref<16x512xf32, #tpu.memory_space<vmem>>, vector<1x256xf32>
    %74 = vector.broadcast %73 : vector<1x256xf32> to vector<16x256xf32>
    %75 = arith.addf %72, %74 : vector<16x256xf32>
    %76 = vector.extract_strided_slice %75 {offsets = [0, 0], sizes = [16, 128], strides = [1, 1]} : vector<16x256xf32> to vector<16x128xf32>
    %77 = vector.extract_strided_slice %75 {offsets = [0, 128], sizes = [16, 128], strides = [1, 1]} : vector<16x256xf32> to vector<16x128xf32>
    %78 = arith.truncf %76 : vector<16x128xf32> to vector<16x128xbf16>
    %c0_30 = arith.constant 0 : index
    %c0_31 = arith.constant 0 : index
    %79 = vector.load %arg5[%c0_30, %c0_31] : memref<128x256xbf16, #tpu.memory_space<vmem>>, vector<128x256xbf16>
    %cst_32 = arith.constant dense<0.000000e+00> : vector<16x256xf32>
    %80 = tpu.matmul %78, %79, %cst_32 {dimension_numbers = #tpu.dot_dimension_numbers<[1], [0], [0], [1], [0, 0, 1, 1], [], []>} : vector<16x128xbf16>, vector<128x256xbf16>, vector<16x256xf32> -> vector<16x256xf32>
    %c5 = arith.constant 5 : index
    %c0_33 = arith.constant 0 : index
    %81 = vector.load %arg7[%c5, %c0_33] : memref<16x512xf32, #tpu.memory_space<vmem>>, vector<1x256xf32>
    %82 = vector.broadcast %81 : vector<1x256xf32> to vector<16x256xf32>
    %83 = arith.addf %80, %82 : vector<16x256xf32>
    %c6 = arith.constant 6 : index
    %c0_34 = arith.constant 0 : index
    %84 = vector.load %arg7[%c6, %c0_34] : memref<16x512xf32, #tpu.memory_space<vmem>>, vector<1x256xf32>
    %c7 = arith.constant 7 : index
    %c0_35 = arith.constant 0 : index
    %85 = vector.load %arg7[%c7, %c0_35] : memref<16x512xf32, #tpu.memory_space<vmem>>, vector<1x256xf32>
    %86 = tpu.iota {dimensions = array<i32: 0>} : vector<16x256xi32>
    %c8_i32_36 = arith.constant 8 : i32
    %87 = vector.broadcast %c8_i32_36 : i32 to vector<16x256xi32>
    %88 = arith.cmpi slt, %86, %87 : vector<16x256xi32>
    %cst_37 = arith.constant 0.000000e+00 : f32
    %89 = vector.broadcast %cst_37 : f32 to vector<16x256xf32>
    %90 = arith.select %88, %83, %89 : vector<16x256xi1>, vector<16x256xf32>
    %91 = arith.subf %83, %90 : vector<16x256xf32>
    %cst_38 = arith.constant dense<0.000000e+00> : vector<256xf32>
    %92 = vector.multi_reduction <add>, %90, %cst_38 [0] : vector<16x256xf32> to vector<256xf32>
    %93 = vector.shape_cast %92 : vector<256xf32> to vector<1x256xf32>
    %cst_39 = arith.constant 1.250000e-01 : f32
    %94 = vector.broadcast %cst_39 : f32 to vector<1x256xf32>
    %95 = arith.mulf %93, %94 : vector<1x256xf32>
    %cst_40 = arith.constant dense<0.000000e+00> : vector<256xf32>
    %96 = vector.multi_reduction <add>, %91, %cst_40 [0] : vector<16x256xf32> to vector<256xf32>
    %97 = vector.shape_cast %96 : vector<256xf32> to vector<1x256xf32>
    %cst_41 = arith.constant 1.250000e-01 : f32
    %98 = vector.broadcast %cst_41 : f32 to vector<1x256xf32>
    %99 = arith.mulf %97, %98 : vector<1x256xf32>
    %100 = arith.mulf %90, %90 : vector<16x256xf32>
    %cst_42 = arith.constant dense<0.000000e+00> : vector<256xf32>
    %101 = vector.multi_reduction <add>, %100, %cst_42 [0] : vector<16x256xf32> to vector<256xf32>
    %102 = vector.shape_cast %101 : vector<256xf32> to vector<1x256xf32>
    %cst_43 = arith.constant 1.250000e-01 : f32
    %103 = vector.broadcast %cst_43 : f32 to vector<1x256xf32>
    %104 = arith.mulf %102, %103 : vector<1x256xf32>
    %105 = arith.mulf %91, %91 : vector<16x256xf32>
    %cst_44 = arith.constant dense<0.000000e+00> : vector<256xf32>
    %106 = vector.multi_reduction <add>, %105, %cst_44 [0] : vector<16x256xf32> to vector<256xf32>
    %107 = vector.shape_cast %106 : vector<256xf32> to vector<1x256xf32>
    %cst_45 = arith.constant 1.250000e-01 : f32
    %108 = vector.broadcast %cst_45 : f32 to vector<1x256xf32>
    %109 = arith.mulf %107, %108 : vector<1x256xf32>
    %110 = arith.mulf %95, %95 : vector<1x256xf32>
    %111 = arith.subf %104, %110 : vector<1x256xf32>
    %cst_46 = arith.constant 0.000000e+00 : f32
    %112 = vector.broadcast %cst_46 : f32 to vector<1x256xf32>
    %113 = arith.maximumf %111, %112 : vector<1x256xf32>
    %114 = arith.mulf %99, %99 : vector<1x256xf32>
    %115 = arith.subf %109, %114 : vector<1x256xf32>
    %cst_47 = arith.constant 0.000000e+00 : f32
    %116 = vector.broadcast %cst_47 : f32 to vector<1x256xf32>
    %117 = arith.maximumf %115, %116 : vector<1x256xf32>
    %118 = vector.shape_cast %95 : vector<1x256xf32> to vector<1x256xf32>
    %119 = vector.broadcast %118 : vector<1x256xf32> to vector<16x256xf32>
    %120 = vector.shape_cast %99 : vector<1x256xf32> to vector<1x256xf32>
    %121 = vector.broadcast %120 : vector<1x256xf32> to vector<16x256xf32>
    %122 = arith.select %88, %119, %121 : vector<16x256xi1>, vector<16x256xf32>
    %123 = vector.shape_cast %113 : vector<1x256xf32> to vector<1x256xf32>
    %124 = vector.broadcast %123 : vector<1x256xf32> to vector<16x256xf32>
    %125 = vector.shape_cast %117 : vector<1x256xf32> to vector<1x256xf32>
    %126 = vector.broadcast %125 : vector<1x256xf32> to vector<16x256xf32>
    %127 = arith.select %88, %124, %126 : vector<16x256xi1>, vector<16x256xf32>
    %128 = arith.subf %83, %122 : vector<16x256xf32>
    %cst_48 = arith.constant 9.99999974E-6 : f32
    %129 = vector.broadcast %cst_48 : f32 to vector<16x256xf32>
    %130 = arith.addf %127, %129 : vector<16x256xf32>
    %131 = math.rsqrt %130 : vector<16x256xf32>
    %132 = arith.mulf %128, %131 : vector<16x256xf32>
    %133 = vector.broadcast %84 : vector<1x256xf32> to vector<16x256xf32>
    %134 = arith.mulf %132, %133 : vector<16x256xf32>
    %135 = vector.broadcast %85 : vector<1x256xf32> to vector<16x256xf32>
    %136 = arith.addf %134, %135 : vector<16x256xf32>
    %cst_49 = arith.constant 0.000000e+00 : f32
    %137 = vector.broadcast %cst_49 : f32 to vector<16x256xf32>
    %138 = arith.maximumf %136, %137 : vector<16x256xf32>
    %139 = arith.truncf %138 : vector<16x256xf32> to vector<16x256xbf16>
    %c0_50 = arith.constant 0 : index
    %c0_51 = arith.constant 0 : index
    %140 = vector.load %arg6[%c0_50, %c0_51] : memref<256x128xbf16, #tpu.memory_space<vmem>>, vector<256x128xbf16>
    %cst_52 = arith.constant dense<0.000000e+00> : vector<16x128xf32>
    %141 = tpu.matmul %139, %140, %cst_52 {dimension_numbers = #tpu.dot_dimension_numbers<[1], [0], [0], [1], [0, 0, 1, 1], [], []>} : vector<16x256xbf16>, vector<256x128xbf16>, vector<16x128xf32> -> vector<16x128xf32>
    %c8 = arith.constant 8 : index
    %c0_53 = arith.constant 0 : index
    %142 = vector.load %arg7[%c8, %c0_53] : memref<16x512xf32, #tpu.memory_space<vmem>>, vector<1x128xf32>
    %143 = vector.broadcast %142 : vector<1x128xf32> to vector<16x128xf32>
    %144 = arith.addf %141, %143 : vector<16x128xf32>
    %c8_i32_54 = arith.constant 8 : i32
    %145 = tpu.dynamic_rotate %77 by %c8_i32_54 dim 0 : vector<16x128xf32>, i32 -> vector<16x128xf32>
    %146 = arith.mulf %144, %145 : vector<16x128xf32>
    %cst_55 = arith.constant dense<0.000000e+00> : vector<16xf32>
    %147 = vector.multi_reduction <add>, %146, %cst_55 [1] : vector<16x128xf32> to vector<16xf32>
    %148 = vector.shape_cast %147 : vector<16xf32> to vector<16x1xf32>
    %149 = arith.mulf %144, %144 : vector<16x128xf32>
    %cst_56 = arith.constant dense<0.000000e+00> : vector<16xf32>
    %150 = vector.multi_reduction <add>, %149, %cst_56 [1] : vector<16x128xf32> to vector<16xf32>
    %151 = vector.shape_cast %150 : vector<16xf32> to vector<16x1xf32>
    %152 = math.sqrt %151 : vector<16x1xf32>
    %153 = arith.mulf %145, %145 : vector<16x128xf32>
    %cst_57 = arith.constant dense<0.000000e+00> : vector<16xf32>
    %154 = vector.multi_reduction <add>, %153, %cst_57 [1] : vector<16x128xf32> to vector<16xf32>
    %155 = vector.shape_cast %154 : vector<16xf32> to vector<16x1xf32>
    %156 = math.sqrt %155 : vector<16x1xf32>
    %cst_58 = arith.constant 9.99999993E-9 : f32
    %157 = vector.broadcast %cst_58 : f32 to vector<16x1xf32>
    %158 = arith.maximumf %152, %157 : vector<16x1xf32>
    %cst_59 = arith.constant 9.99999993E-9 : f32
    %159 = vector.broadcast %cst_59 : f32 to vector<16x1xf32>
    %160 = arith.maximumf %156, %159 : vector<16x1xf32>
    %161 = arith.mulf %158, %160 : vector<16x1xf32>
    %162 = arith.divf %148, %161 : vector<16x1xf32>
    %163 = vector.shape_cast %162 : vector<16x1xf32> to vector<1x16x1xf32>
    %cst_60 = arith.constant dense<0.000000e+00> : vector<1xf32>
    %164 = vector.multi_reduction <add>, %163, %cst_60 [1, 2] : vector<1x16x1xf32> to vector<1xf32>
    %165 = vector.shape_cast %164 : vector<1xf32> to vector<1x1x1xf32>
    %166 = vector.extract %165[0, 0, 0] : f32 from vector<1x1x1xf32>
    %cst_61 = arith.constant 1.600000e+01 : f32
    %167 = arith.divf %166, %cst_61 : f32
    %cst_62 = arith.constant 0.000000e+00 : f32
    %168 = arith.subf %cst_62, %167 : f32
    %c0_63 = arith.constant 0 : index
    %c0_64 = arith.constant 0 : index
    %169 = memref.load %arg8[%c0_63, %c0_64] : memref<1x1xf32, #tpu.memory_space<smem>>
    memref.store %168, %arg8[%c0_63, %c0_64] : memref<1x1xf32, #tpu.memory_space<smem>>
    return
  }
}

</mosaic_0001>

<llo_original>
// kernel: byol_forward.1
$region0: #{byol_forward.1}
  #allocation0 [shape = 'u32[]', space=smem, size = 0x4, offset = 0x4, fixed_abs, tag = 'smem constant byte address 0x4 - core index']
  #allocation1 [shape = 'u32[72,128]{1,0:T(1,128)}', space=vmem, size = 0x9000, scoped, tag = 'internal scratch']
  %s0 = inlined_call_operand.vmem [shape: f32[8,1024], index: 0, kind: input, shape index: {}]
  %s1 = inlined_call_operand.vmem [shape: f32[8,1024], index: 1, kind: input, shape index: {}]
  %s2 = inlined_call_operand.hbm [shape: bf16[1024,256], index: 2, kind: input, shape index: {}]
  %s3 = inlined_call_operand.vmem [shape: bf16[256,512], index: 3, kind: input, shape index: {}]
  %s4 = inlined_call_operand.hbm [shape: bf16[512,256], index: 4, kind: input, shape index: {}]
  %s5 = inlined_call_operand.vmem [shape: bf16[128,256], index: 5, kind: input, shape index: {}]
  %s6 = inlined_call_operand.hbm [shape: bf16[256,128], index: 6, kind: input, shape index: {}]
  %s7 = inlined_call_operand.hbm [shape: f32[16,512], index: 7, kind: input, shape index: {}]
  %s8 = inlined_call_operand.hbm [shape: f32[1,1], index: 8, kind: output, shape index: {}]
  %s9 = sld [smem:[#allocation0]]
  $region58: #{byol_forward.1} parent=0
    _
  %s11 = ssub.s32 1, %s9
  %s12 = scalar_select 0, %s11, %s9
  $region1: #{byol_forward.1} parent=0
    #allocation2 [shape = 'u8[524288]{0}', space=vmem, size = 0x80000, scoped, tag = 'input window, operand 2, single buffered']
    #allocation3 [shape = 's32[1]{0}', space=sflag, size = 0x4, scoped, tag = 'scoped memory for byol_forward.1']
    #allocation4 [shape = 's32[1]{0}', space=sflag, size = 0x4, scoped, tag = 'scoped memory for byol_forward.1']
    #allocation5 [shape = 'u8[262144]{0}', space=vmem, size = 0x40000, scoped, tag = 'input window, operand 4, single buffered']
    #allocation6 [shape = 's32[1]{0}', space=sflag, size = 0x4, scoped, tag = 'scoped memory for byol_forward.1']
    #allocation7 [shape = 'u8[65536]{0}', space=vmem, size = 0x10000, scoped, tag = 'input window, operand 6, single buffered']
    #allocation8 [shape = 'u8[32768]{0}', space=vmem, size = 0x8000, scoped, tag = 'input window, operand 7, single buffered']
    #allocation9 [shape = 's32[1]{0}', space=sflag, size = 0x4, scoped, tag = 'scoped memory for byol_forward.1']
    #allocation10 [shape = 'u8[512]{0}', space=smem, size = 0x200, scoped, tag = 'output window, operand 0, single buffered']
    %13 = vsyncpa [#allocation3], 0
    %14 = vsyncpa [#allocation6], 0
    %15 = vsyncpa [#allocation9], 0
    %16 = vsyncpa [#allocation4], 0
    // Predicated region
    $region2: #{byol_forward.1} parent=1 // pred_check
      _
    $region3: #{byol_forward.1} parent=1 // pred_check_branch
      %18 = sbr.rel (0) target = $region5
    $region4: #{byol_forward.1} parent=1 // pred_region
      _
    $region5: #{byol_forward.1} parent=1 // pred_fallthru
      _
    // Predicated region
    $region6: #{byol_forward.1} parent=1 // pred_check
      _
    $region7: #{byol_forward.1} parent=1 // pred_check_branch
      %20 = sbr.rel (0) target = $region9
    $region8: #{byol_forward.1} parent=1 // pred_region
      _
    $region9: #{byol_forward.1} parent=1 // pred_fallthru
      _
    // Predicated region
    $region10: #{byol_forward.1} parent=1 // pred_check
      _
    $region11: #{byol_forward.1} parent=1 // pred_check_branch
      %22 = sbr.rel (0) target = $region13
    $region12: #{byol_forward.1} parent=1 // pred_region
      %24 = vsyncadd [#allocation3], 0
      %s25 = sshll.u32 %s2, 4
      %s26 = int_to_ptr.hbm [resolvable:$true] %s25
      %s27 = sshll.u32 [#allocation2], 4
      %s28 = int_to_ptr.vmem [resolvable:$true] %s27
      %33 = dma.hbm_to_vmem [thread:$0]  %s26, 16384, %s28, [#allocation3], 128, 128, 8
    $region13: #{byol_forward.1} parent=1 // pred_fallthru
      _
    // Predicated region
    $region14: #{byol_forward.1} parent=1 // pred_check
      _
    $region15: #{byol_forward.1} parent=1 // pred_check_branch
      %35 = sbr.rel (0) target = $region17
    $region16: #{byol_forward.1} parent=1 // pred_region
      _
    $region17: #{byol_forward.1} parent=1 // pred_fallthru
      _
    // Predicated region
    $region18: #{byol_forward.1} parent=1 // pred_check
      _
    $region19: #{byol_forward.1} parent=1 // pred_check_branch
      %37 = sbr.rel (0) target = $region21
    $region20: #{byol_forward.1} parent=1 // pred_region
      %39 = vsyncadd [#allocation6], 0
      %s40 = sshll.u32 %s4, 4
      %s41 = int_to_ptr.hbm [resolvable:$true] %s40
      %s42 = sshll.u32 [#allocation5], 4
      %s43 = int_to_ptr.vmem [resolvable:$true] %s42
      %48 = dma.hbm_to_vmem [thread:$0]  %s41, 8192, %s43, [#allocation6], 128, 128, 8
    $region21: #{byol_forward.1} parent=1 // pred_fallthru
      _
    // Predicated region
    $region22: #{byol_forward.1} parent=1 // pred_check
      _
    $region23: #{byol_forward.1} parent=1 // pred_check_branch
      %50 = sbr.rel (0) target = $region25
    $region24: #{byol_forward.1} parent=1 // pred_region
      _
    $region25: #{byol_forward.1} parent=1 // pred_fallthru
      _
    // Predicated region
    $region26: #{byol_forward.1} parent=1 // pred_check
      _
    $region27: #{byol_forward.1} parent=1 // pred_check_branch
      %52 = sbr.rel (0) target = $region29
    $region28: #{byol_forward.1} parent=1 // pred_region
      %54 = vsyncadd [#allocation6], 0
      %s55 = sshll.u32 %s6, 4
      %s56 = int_to_ptr.hbm [resolvable:$true] %s55
      %s57 = sshll.u32 [#allocation7], 4
      %s58 = int_to_ptr.vmem [resolvable:$true] %s57
      %63 = dma.hbm_to_vmem [thread:$0]  %s56, 2048, %s58, [#allocation6], 64, 64, 4
    $region29: #{byol_forward.1} parent=1 // pred_fallthru
      _
    // Predicated region
    $region30: #{byol_forward.1} parent=1 // pred_check
      _
    $region31: #{byol_forward.1} parent=1 // pred_check_branch
      %65 = sbr.rel (0) target = $region33
    $region32: #{byol_forward.1} parent=1 // pred_region
      %67 = vsyncadd [#allocation9], 0
      %s68 = sshll.u32 %s7, 4
      %s69 = int_to_ptr.hbm [resolvable:$true] %s68
      %s70 = sshll.u32 [#allocation8], 4
      %s71 = int_to_ptr.vmem [resolvable:$true] %s70
      %76 = dma.hbm_to_vmem [thread:$0]  %s69, 1024, %s71, [#allocation9], 512, 512, 32
    $region33: #{byol_forward.1} parent=1 // pred_fallthru
      _
    // Predicated region
    $region34: #{byol_forward.1} parent=1 // pred_check
      _
    $region35: #{byol_forward.1} parent=1 // pred_check_branch
      %78 = sbr.rel (0) target = $region37
    $region36: #{byol_forward.1} parent=1 // pred_region
      %80 = dma.done [#allocation3], 16384
    $region37: #{byol_forward.1} parent=1 // pred_fallthru
      _
    // Predicated region
    $region38: #{byol_forward.1} parent=1 // pred_check
      _
    $region39: #{byol_forward.1} parent=1 // pred_check_branch
      %82 = sbr.rel (0) target = $region41
    $region40: #{byol_forward.1} parent=1 // pred_region
      %84 = dma.done [#allocation6], 8192
    $region41: #{byol_forward.1} parent=1 // pred_fallthru
      _
    // Predicated region
    $region42: #{byol_forward.1} parent=1 // pred_check
      _
    $region43: #{byol_forward.1} parent=1 // pred_check_branch
      %86 = sbr.rel (0) target = $region45
    $region44: #{byol_forward.1} parent=1 // pred_region
      %88 = dma.done [#allocation6], 2048
    $region45: #{byol_forward.1} parent=1 // pred_fallthru
      _
    // Predicated region
    $region46: #{byol_forward.1} parent=1 // pred_check
      _
    $region47: #{byol_forward.1} parent=1 // pred_check_branch
      %90 = sbr.rel (0) target = $region49
    $region48: #{byol_forward.1} parent=1 // pred_region
      %92 = dma.done [#allocation9], 1024
    $region49: #{byol_forward.1} parent=1 // pred_fallthru
      _
    %v93 = vld [vmem:[%s0] sm:$0xff]
    %v94 = vld [vmem:[%s0 + $0x8] sm:$0xff]
    %v95 = vld [vmem:[%s0 + $0x10] sm:$0xff]
    %v96 = vld [vmem:[%s0 + $0x18] sm:$0xff]
    %v97 = vld [vmem:[%s0 + $0x20] sm:$0xff]
    %v98 = vld [vmem:[%s0 + $0x28] sm:$0xff]
    %v99 = vld [vmem:[%s0 + $0x30] sm:$0xff]
    %v100 = vld [vmem:[%s0 + $0x38] sm:$0xff]
    %v101 = vld [vmem:[%s1] sm:$0xff]
    %v102 = vld [vmem:[%s1 + $0x8] sm:$0xff]
    %v103 = vld [vmem:[%s1 + $0x10] sm:$0xff]
    %v104 = vld [vmem:[%s1 + $0x18] sm:$0xff]
    %v105 = vld [vmem:[%s1 + $0x20] sm:$0xff]
    %v106 = vld [vmem:[%s1 + $0x28] sm:$0xff]
    %v107 = vld [vmem:[%s1 + $0x30] sm:$0xff]
    %v108 = vld [vmem:[%s1 + $0x38] sm:$0xff]
    %v109 = vpack.c.bf16 %v101, %v93
    %v110 = vpack.c.bf16 %v102, %v94
    %v111 = vpack.c.bf16 %v103, %v95
    %v112 = vpack.c.bf16 %v104, %v96
    %v113 = vpack.c.bf16 %v105, %v97
    %v114 = vpack.c.bf16 %v106, %v98
    %v115 = vpack.c.bf16 %v107, %v99
    %v116 = vpack.c.bf16 %v108, %v100
    %v117 = vld [vmem:[#allocation2] sm:$0xff]
    %v118 = vld [vmem:[#allocation2 + $0x8] sm:$0xff]
    %v119 = vld [vmem:[#allocation2 + $0x10] sm:$0xff]
    %v120 = vld [vmem:[#allocation2 + $0x18] sm:$0xff]
    %v121 = vld [vmem:[#allocation2 + $0x20] sm:$0xff]
    %v122 = vld [vmem:[#allocation2 + $0x28] sm:$0xff]
    %v123 = vld [vmem:[#allocation2 + $0x30] sm:$0xff]
    %v124 = vld [vmem:[#allocation2 + $0x38] sm:$0xff]
    %v125 = vld [vmem:[#allocation2 + $0x40] sm:$0xff]
    %v126 = vld [vmem:[#allocation2 + $0x48] sm:$0xff]
    %v127 = vld [vmem:[#allocation2 + $0x50] sm:$0xff]
    %v128 = vld [vmem:[#allocation2 + $0x58] sm:$0xff]
    %v129 = vld [vmem:[#allocation2 + $0x60] sm:$0xff]
    %v130 = vld [vmem:[#allocation2 + $0x68] sm:$0xff]
    %v131 = vld [vmem:[#allocation2 + $0x70] sm:$0xff]
    %v132 = vld [vmem:[#allocation2 + $0x78] sm:$0xff]
    %v133 = vld [vmem:[#allocation2 + $0x80] sm:$0xff]
    %v134 = vld [vmem:[#allocation2 + $0x88] sm:$0xff]
    %v135 = vld [vmem:[#allocation2 + $0x90] sm:$0xff]
    %v136 = vld [vmem:[#allocation2 + $0x98] sm:$0xff]
    %v137 = vld [vmem:[#allocation2 + $0xa0] sm:$0xff]
    %v138 = vld [vmem:[#allocation2 + $0xa8] sm:$0xff]
    %v139 = vld [vmem:[#allocation2 + $0xb0] sm:$0xff]
    %v140 = vld [vmem:[#allocation2 + $0xb8] sm:$0xff]
    %v141 = vld [vmem:[#allocation2 + $0xc0] sm:$0xff]
    %v142 = vld [vmem:[#allocation2 + $0xc8] sm:$0xff]
    %v143 = vld [vmem:[#allocation2 + $0xd0] sm:$0xff]
    %v144 = vld [vmem:[#allocation2 + $0xd8] sm:$0xff]
    %v145 = vld [vmem:[#allocation2 + $0xe0] sm:$0xff]
    %v146 = vld [vmem:[#allocation2 + $0xe8] sm:$0xff]
    %v147 = vld [vmem:[#allocation2 + $0xf0] sm:$0xff]
    %v148 = vld [vmem:[#allocation2 + $0xf8] sm:$0xff]
    %v149 = vld [vmem:[#allocation2 + $0x100] sm:$0xff]
    %v150 = vld [vmem:[#allocation2 + $0x108] sm:$0xff]
    %v151 = vld [vmem:[#allocation2 + $0x110] sm:$0xff]
    %v152 = vld [vmem:[#allocation2 + $0x118] sm:$0xff]
    %v153 = vld [vmem:[#allocation2 + $0x120] sm:$0xff]
    %v154 = vld [vmem:[#allocation2 + $0x128] sm:$0xff]
    %v155 = vld [vmem:[#allocation2 + $0x130] sm:$0xff]
    %v156 = vld [vmem:[#allocation2 + $0x138] sm:$0xff]
    %v157 = vld [vmem:[#allocation2 + $0x140] sm:$0xff]
    %v158 = vld [vmem:[#allocation2 + $0x148] sm:$0xff]
    %v159 = vld [vmem:[#allocation2 + $0x150] sm:$0xff]
    %v160 = vld [vmem:[#allocation2 + $0x158] sm:$0xff]
    %v161 = vld [vmem:[#allocation2 + $0x160] sm:$0xff]
    %v162 = vld [vmem:[#allocation2 + $0x168] sm:$0xff]
    %v163 = vld [vmem:[#allocation2 + $0x170] sm:$0xff]
    %v164 = vld [vmem:[#allocation2 + $0x178] sm:$0xff]
    %v165 = vld [vmem:[#allocation2 + $0x180] sm:$0xff]
    %v166 = vld [vmem:[#allocation2 + $0x188] sm:$0xff]
    %v167 = vld [vmem:[#allocation2 + $0x190] sm:$0xff]
    %v168 = vld [vmem:[#allocation2 + $0x198] sm:$0xff]
    %v169 = vld [vmem:[#allocation2 + $0x1a0] sm:$0xff]
    %v170 = vld [vmem:[#allocation2 + $0x1a8] sm:$0xff]
    %v171 = vld [vmem:[#allocation2 + $0x1b0] sm:$0xff]
    %v172 = vld [vmem:[#allocation2 + $0x1b8] sm:$0xff]
    %v173 = vld [vmem:[#allocation2 + $0x1c0] sm:$0xff]
    %v174 = vld [vmem:[#allocation2 + $0x1c8] sm:$0xff]
    %v175 = vld [vmem:[#allocation2 + $0x1d0] sm:$0xff]
    %v176 = vld [vmem:[#allocation2 + $0x1d8] sm:$0xff]
    %v177 = vld [vmem:[#allocation2 + $0x1e0] sm:$0xff]
    %v178 = vld [vmem:[#allocation2 + $0x1e8] sm:$0xff]
    %v179 = vld [vmem:[#allocation2 + $0x1f0] sm:$0xff]
    %v180 = vld [vmem:[#allocation2 + $0x1f8] sm:$0xff]
    %v181 = vld [vmem:[#allocation2 + $0x200] sm:$0xff]
    %v182 = vld [vmem:[#allocation2 + $0x208] sm:$0xff]
    %v183 = vld [vmem:[#allocation2 + $0x210] sm:$0xff]
    %v184 = vld [vmem:[#allocation2 + $0x218] sm:$0xff]
    %v185 = vld [vmem:[#allocation2 + $0x220] sm:$0xff]
    %v186 = vld [vmem:[#allocation2 + $0x228] sm:$0xff]
    %v187 = vld [vmem:[#allocation2 + $0x230] sm:$0xff]
    %v188 = vld [vmem:[#allocation2 + $0x238] sm:$0xff]
    %v189 = vld [vmem:[#allocation2 + $0x240] sm:$0xff]
    %v190 = vld [vmem:[#allocation2 + $0x248] sm:$0xff]
    %v191 = vld [vmem:[#allocation2 + $0x250] sm:$0xff]
    %v192 = vld [vmem:[#allocation2 + $0x258] sm:$0xff]
    %v193 = vld [vmem:[#allocation2 + $0x260] sm:$0xff]
    %v194 = vld [vmem:[#allocation2 + $0x268] sm:$0xff]
    %v195 = vld [vmem:[#allocation2 + $0x270] sm:$0xff]
    %v196 = vld [vmem:[#allocation2 + $0x278] sm:$0xff]
    %v197 = vld [vmem:[#allocation2 + $0x280] sm:$0xff]
    %v198 = vld [vmem:[#allocation2 + $0x288] sm:$0xff]
    %v199 = vld [vmem:[#allocation2 + $0x290] sm:$0xff]
    %v200 = vld [vmem:[#allocation2 + $0x298] sm:$0xff]
    %v201 = vld [vmem:[#allocation2 + $0x2a0] sm:$0xff]
    %v202 = vld [vmem:[#allocation2 + $0x2a8] sm:$0xff]
    %v203 = vld [vmem:[#allocation2 + $0x2b0] sm:$0xff]
    %v204 = vld [vmem:[#allocation2 + $0x2b8] sm:$0xff]
    %v205 = vld [vmem:[#allocation2 + $0x2c0] sm:$0xff]
    %v206 = vld [vmem:[#allocation2 + $0x2c8] sm:$0xff]
    %v207 = vld [vmem:[#allocation2 + $0x2d0] sm:$0xff]
    %v208 = vld [vmem:[#allocation2 + $0x2d8] sm:$0xff]
    %v209 = vld [vmem:[#allocation2 + $0x2e0] sm:$0xff]
    %v210 = vld [vmem:[#allocation2 + $0x2e8] sm:$0xff]
    %v211 = vld [vmem:[#allocation2 + $0x2f0] sm:$0xff]
    %v212 = vld [vmem:[#allocation2 + $0x2f8] sm:$0xff]
    %v213 = vld [vmem:[#allocation2 + $0x300] sm:$0xff]
    %v214 = vld [vmem:[#allocation2 + $0x308] sm:$0xff]
    %v215 = vld [vmem:[#allocation2 + $0x310] sm:$0xff]
    %v216 = vld [vmem:[#allocation2 + $0x318] sm:$0xff]
    %v217 = vld [vmem:[#allocation2 + $0x320] sm:$0xff]
    %v218 = vld [vmem:[#allocation2 + $0x328] sm:$0xff]
    %v219 = vld [vmem:[#allocation2 + $0x330] sm:$0xff]
    %v220 = vld [vmem:[#allocation2 + $0x338] sm:$0xff]
    %v221 = vld [vmem:[#allocation2 + $0x340] sm:$0xff]
    %v222 = vld [vmem:[#allocation2 + $0x348] sm:$0xff]
    %v223 = vld [vmem:[#allocation2 + $0x350] sm:$0xff]
    %v224 = vld [vmem:[#allocation2 + $0x358] sm:$0xff]
    %v225 = vld [vmem:[#allocation2 + $0x360] sm:$0xff]
    %v226 = vld [vmem:[#allocation2 + $0x368] sm:$0xff]
    %v227 = vld [vmem:[#allocation2 + $0x370] sm:$0xff]
    %v228 = vld [vmem:[#allocation2 + $0x378] sm:$0xff]
    %v229 = vld [vmem:[#allocation2 + $0x380] sm:$0xff]
    %v230 = vld [vmem:[#allocation2 + $0x388] sm:$0xff]
    %v231 = vld [vmem:[#allocation2 + $0x390] sm:$0xff]
    %v232 = vld [vmem:[#allocation2 + $0x398] sm:$0xff]
    %v233 = vld [vmem:[#allocation2 + $0x3a0] sm:$0xff]
    %v234 = vld [vmem:[#allocation2 + $0x3a8] sm:$0xff]
    %v235 = vld [vmem:[#allocation2 + $0x3b0] sm:$0xff]
    %v236 = vld [vmem:[#allocation2 + $0x3b8] sm:$0xff]
    %v237 = vld [vmem:[#allocation2 + $0x3c0] sm:$0xff]
    %v238 = vld [vmem:[#allocation2 + $0x3c8] sm:$0xff]
    %v239 = vld [vmem:[#allocation2 + $0x3d0] sm:$0xff]
    %v240 = vld [vmem:[#allocation2 + $0x3d8] sm:$0xff]
    %v241 = vld [vmem:[#allocation2 + $0x3e0] sm:$0xff]
    %v242 = vld [vmem:[#allocation2 + $0x3e8] sm:$0xff]
    %v243 = vld [vmem:[#allocation2 + $0x3f0] sm:$0xff]
    %v244 = vld [vmem:[#allocation2 + $0x3f8] sm:$0xff]
    %v245 = vld [vmem:[#allocation8] ss:$8 sm:$0x3]
    %v247 = vperm.slane %v245, 0
    %v248 = vperm.slane %v245, 1
    %v379 = vunpack.c.l.b16 %v117
    %v380 = vunpack.c.h.b16 %v117
    %v381 = vunpack.c.l.b16 %v118
    %v382 = vunpack.c.h.b16 %v118
    %v383 = vunpack.c.l.b16 %v119
    %v384 = vunpack.c.h.b16 %v119
    %v385 = vunpack.c.l.b16 %v120
    %v386 = vunpack.c.h.b16 %v120
    %v387 = vunpack.c.l.b16 %v121
    %v388 = vunpack.c.h.b16 %v121
    %v389 = vunpack.c.l.b16 %v122
    %v390 = vunpack.c.h.b16 %v122
    %v391 = vunpack.c.l.b16 %v123
    %v392 = vunpack.c.h.b16 %v123
    %v393 = vunpack.c.l.b16 %v124
    %v394 = vunpack.c.h.b16 %v124
    %v395 = vunpack.c.l.b16 %v125
    %v396 = vunpack.c.h.b16 %v125
    %v397 = vunpack.c.l.b16 %v126
    %v398 = vunpack.c.h.b16 %v126
    %v399 = vunpack.c.l.b16 %v127
    %v400 = vunpack.c.h.b16 %v127
    %v401 = vunpack.c.l.b16 %v128
    %v402 = vunpack.c.h.b16 %v128
    %v403 = vunpack.c.l.b16 %v129
    %v404 = vunpack.c.h.b16 %v129
    %v405 = vunpack.c.l.b16 %v130
    %v406 = vunpack.c.h.b16 %v130
    %v407 = vunpack.c.l.b16 %v131
    %v408 = vunpack.c.h.b16 %v131
    %v409 = vunpack.c.l.b16 %v132
    %v410 = vunpack.c.h.b16 %v132
    %v411 = vunpack.c.l.b16 %v133
    %v412 = vunpack.c.h.b16 %v133
    %v413 = vunpack.c.l.b16 %v134
    %v414 = vunpack.c.h.b16 %v134
    %v415 = vunpack.c.l.b16 %v135
    %v416 = vunpack.c.h.b16 %v135
    %v417 = vunpack.c.l.b16 %v136
    %v418 = vunpack.c.h.b16 %v136
    %v419 = vunpack.c.l.b16 %v137
    %v420 = vunpack.c.h.b16 %v137
    %v421 = vunpack.c.l.b16 %v138
    %v422 = vunpack.c.h.b16 %v138
    %v423 = vunpack.c.l.b16 %v139
    %v424 = vunpack.c.h.b16 %v139
    %v425 = vunpack.c.l.b16 %v140
    %v426 = vunpack.c.h.b16 %v140
    %v427 = vunpack.c.l.b16 %v141
    %v428 = vunpack.c.h.b16 %v141
    %v429 = vunpack.c.l.b16 %v142
    %v430 = vunpack.c.h.b16 %v142
    %v431 = vunpack.c.l.b16 %v143
    %v432 = vunpack.c.h.b16 %v143
    %v433 = vunpack.c.l.b16 %v144
    %v434 = vunpack.c.h.b16 %v144
    %v435 = vunpack.c.l.b16 %v145
    %v436 = vunpack.c.h.b16 %v145
    %v437 = vunpack.c.l.b16 %v146
    %v438 = vunpack.c.h.b16 %v146
    %v439 = vunpack.c.l.b16 %v147
    %v440 = vunpack.c.h.b16 %v147
    %v441 = vunpack.c.l.b16 %v148
    %v442 = vunpack.c.h.b16 %v148
    %v443 = vunpack.c.l.b16 %v149
    %v444 = vunpack.c.h.b16 %v149
    %v445 = vunpack.c.l.b16 %v150
    %v446 = vunpack.c.h.b16 %v150
    %v447 = vunpack.c.l.b16 %v151
    %v448 = vunpack.c.h.b16 %v151
    %v449 = vunpack.c.l.b16 %v152
    %v450 = vunpack.c.h.b16 %v152
    %v451 = vunpack.c.l.b16 %v153
    %v452 = vunpack.c.h.b16 %v153
    %v453 = vunpack.c.l.b16 %v154
    %v454 = vunpack.c.h.b16 %v154
    %v455 = vunpack.c.l.b16 %v155
    %v456 = vunpack.c.h.b16 %v155
    %v457 = vunpack.c.l.b16 %v156
    %v458 = vunpack.c.h.b16 %v156
    %v459 = vunpack.c.l.b16 %v157
    %v460 = vunpack.c.h.b16 %v157
    %v461 = vunpack.c.l.b16 %v158
    %v462 = vunpack.c.h.b16 %v158
    %v463 = vunpack.c.l.b16 %v159
    %v464 = vunpack.c.h.b16 %v159
    %v465 = vunpack.c.l.b16 %v160
    %v466 = vunpack.c.h.b16 %v160
    %v467 = vunpack.c.l.b16 %v161
    %v468 = vunpack.c.h.b16 %v161
    %v469 = vunpack.c.l.b16 %v162
    %v470 = vunpack.c.h.b16 %v162
    %v471 = vunpack.c.l.b16 %v163
    %v472 = vunpack.c.h.b16 %v163
    %v473 = vunpack.c.l.b16 %v164
    %v474 = vunpack.c.h.b16 %v164
    %v475 = vunpack.c.l.b16 %v165
    %v476 = vunpack.c.h.b16 %v165
    %v477 = vunpack.c.l.b16 %v166
    %v478 = vunpack.c.h.b16 %v166
    %v479 = vunpack.c.l.b16 %v167
    %v480 = vunpack.c.h.b16 %v167
    %v481 = vunpack.c.l.b16 %v168
    %v482 = vunpack.c.h.b16 %v168
    %v483 = vunpack.c.l.b16 %v169
    %v484 = vunpack.c.h.b16 %v169
    %v485 = vunpack.c.l.b16 %v170
    %v486 = vunpack.c.h.b16 %v170
    %v487 = vunpack.c.l.b16 %v171
    %v488 = vunpack.c.h.b16 %v171
    %v489 = vunpack.c.l.b16 %v172
    %v490 = vunpack.c.h.b16 %v172
    %v491 = vunpack.c.l.b16 %v173
    %v492 = vunpack.c.h.b16 %v173
    %v493 = vunpack.c.l.b16 %v174
    %v494 = vunpack.c.h.b16 %v174
    %v495 = vunpack.c.l.b16 %v175
    %v496 = vunpack.c.h.b16 %v175
    %v497 = vunpack.c.l.b16 %v176
    %v498 = vunpack.c.h.b16 %v176
    %v499 = vunpack.c.l.b16 %v177
    %v500 = vunpack.c.h.b16 %v177
    %v501 = vunpack.c.l.b16 %v178
    %v502 = vunpack.c.h.b16 %v178
    %v503 = vunpack.c.l.b16 %v179
    %v504 = vunpack.c.h.b16 %v179
    %v505 = vunpack.c.l.b16 %v180
    %v506 = vunpack.c.h.b16 %v180
    %v507 = vunpack.c.l.b16 %v181
    %v508 = vunpack.c.h.b16 %v181
    %v509 = vunpack.c.l.b16 %v182
    %v510 = vunpack.c.h.b16 %v182
    %v511 = vunpack.c.l.b16 %v183
    %v512 = vunpack.c.h.b16 %v183
    %v513 = vunpack.c.l.b16 %v184
    %v514 = vunpack.c.h.b16 %v184
    %v515 = vunpack.c.l.b16 %v185
    %v516 = vunpack.c.h.b16 %v185
    %v517 = vunpack.c.l.b16 %v186
    %v518 = vunpack.c.h.b16 %v186
    %v519 = vunpack.c.l.b16 %v187
    %v520 = vunpack.c.h.b16 %v187
    %v521 = vunpack.c.l.b16 %v188
    %v522 = vunpack.c.h.b16 %v188
    %v523 = vunpack.c.l.b16 %v189
    %v524 = vunpack.c.h.b16 %v189
    %v525 = vunpack.c.l.b16 %v190
    %v526 = vunpack.c.h.b16 %v190
    %v527 = vunpack.c.l.b16 %v191
    %v528 = vunpack.c.h.b16 %v191
    %v529 = vunpack.c.l.b16 %v192
    %v530 = vunpack.c.h.b16 %v192
    %v531 = vunpack.c.l.b16 %v193
    %v532 = vunpack.c.h.b16 %v193
    %v533 = vunpack.c.l.b16 %v194
    %v534 = vunpack.c.h.b16 %v194
    %v535 = vunpack.c.l.b16 %v195
    %v536 = vunpack.c.h.b16 %v195
    %v537 = vunpack.c.l.b16 %v196
    %v538 = vunpack.c.h.b16 %v196
    %v539 = vunpack.c.l.b16 %v197
    %v540 = vunpack.c.h.b16 %v197
    %v541 = vunpack.c.l.b16 %v198
    %v542 = vunpack.c.h.b16 %v198
    %v543 = vunpack.c.l.b16 %v199
    %v544 = vunpack.c.h.b16 %v199
    %v545 = vunpack.c.l.b16 %v200
    %v546 = vunpack.c.h.b16 %v200
    %v547 = vunpack.c.l.b16 %v201
    %v548 = vunpack.c.h.b16 %v201
    %v549 = vunpack.c.l.b16 %v202
    %v550 = vunpack.c.h.b16 %v202
    %v551 = vunpack.c.l.b16 %v203
    %v552 = vunpack.c.h.b16 %v203
    %v553 = vunpack.c.l.b16 %v204
    %v554 = vunpack.c.h.b16 %v204
    %v555 = vunpack.c.l.b16 %v205
    %v556 = vunpack.c.h.b16 %v205
    %v557 = vunpack.c.l.b16 %v206
    %v558 = vunpack.c.h.b16 %v206
    %v559 = vunpack.c.l.b16 %v207
    %v560 = vunpack.c.h.b16 %v207
    %v561 = vunpack.c.l.b16 %v208
    %v562 = vunpack.c.h.b16 %v208
    %v563 = vunpack.c.l.b16 %v209
    %v564 = vunpack.c.h.b16 %v209
    %v565 = vunpack.c.l.b16 %v210
    %v566 = vunpack.c.h.b16 %v210
    %v567 = vunpack.c.l.b16 %v211
    %v568 = vunpack.c.h.b16 %v211
    %v569 = vunpack.c.l.b16 %v212
    %v570 = vunpack.c.h.b16 %v212
    %v571 = vunpack.c.l.b16 %v213
    %v572 = vunpack.c.h.b16 %v213
    %v573 = vunpack.c.l.b16 %v214
    %v574 = vunpack.c.h.b16 %v214
    %v575 = vunpack.c.l.b16 %v215
    %v576 = vunpack.c.h.b16 %v215
    %v577 = vunpack.c.l.b16 %v216
    %v578 = vunpack.c.h.b16 %v216
    %v579 = vunpack.c.l.b16 %v217
    %v580 = vunpack.c.h.b16 %v217
    %v581 = vunpack.c.l.b16 %v218
    %v582 = vunpack.c.h.b16 %v218
    %v583 = vunpack.c.l.b16 %v219
    %v584 = vunpack.c.h.b16 %v219
    %v585 = vunpack.c.l.b16 %v220
    %v586 = vunpack.c.h.b16 %v220
    %v587 = vunpack.c.l.b16 %v221
    %v588 = vunpack.c.h.b16 %v221
    %v589 = vunpack.c.l.b16 %v222
    %v590 = vunpack.c.h.b16 %v222
    %v591 = vunpack.c.l.b16 %v223
    %v592 = vunpack.c.h.b16 %v223
    %v593 = vunpack.c.l.b16 %v224
    %v594 = vunpack.c.h.b16 %v224
    %v595 = vunpack.c.l.b16 %v225
    %v596 = vunpack.c.h.b16 %v225
    %v597 = vunpack.c.l.b16 %v226
    %v598 = vunpack.c.h.b16 %v226
    %v599 = vunpack.c.l.b16 %v227
    %v600 = vunpack.c.h.b16 %v227
    %v601 = vunpack.c.l.b16 %v228
    %v602 = vunpack.c.h.b16 %v228
    %v603 = vunpack.c.l.b16 %v229
    %v604 = vunpack.c.h.b16 %v229
    %v605 = vunpack.c.l.b16 %v230
    %v606 = vunpack.c.h.b16 %v230
    %v607 = vunpack.c.l.b16 %v231
    %v608 = vunpack.c.h.b16 %v231
    %v609 = vunpack.c.l.b16 %v232
    %v610 = vunpack.c.h.b16 %v232
    %v611 = vunpack.c.l.b16 %v233
    %v612 = vunpack.c.h.b16 %v233
    %v613 = vunpack.c.l.b16 %v234
    %v614 = vunpack.c.h.b16 %v234
    %v615 = vunpack.c.l.b16 %v235
    %v616 = vunpack.c.h.b16 %v235
    %v617 = vunpack.c.l.b16 %v236
    %v618 = vunpack.c.h.b16 %v236
    %v619 = vunpack.c.l.b16 %v237
    %v620 = vunpack.c.h.b16 %v237
    %v621 = vunpack.c.l.b16 %v238
    %v622 = vunpack.c.h.b16 %v238
    %v623 = vunpack.c.l.b16 %v239
    %v624 = vunpack.c.h.b16 %v239
    %v625 = vunpack.c.l.b16 %v240
    %v626 = vunpack.c.h.b16 %v240
    %v627 = vunpack.c.l.b16 %v241
    %v628 = vunpack.c.h.b16 %v241
    %v629 = vunpack.c.l.b16 %v242
    %v630 = vunpack.c.h.b16 %v242
    %v631 = vunpack.c.l.b16 %v243
    %v632 = vunpack.c.h.b16 %v243
    %v633 = vunpack.c.l.b16 %v244
    %v634 = vunpack.c.h.b16 %v244
    %v635 = vpack.c.b16 %v381, %v379
    %v636 = vpack.c.b16 %v382, %v380
    %v637 = vpack.c.b16 %v385, %v383
    %v638 = vpack.c.b16 %v386, %v384
    %v639 = vpack.c.b16 %v389, %v387
    %v640 = vpack.c.b16 %v390, %v388
    %v641 = vpack.c.b16 %v393, %v391
    %v642 = vpack.c.b16 %v394, %v392
    %v643 = vpack.c.b16 %v397, %v395
    %v644 = vpack.c.b16 %v398, %v396
    %v645 = vpack.c.b16 %v401, %v399
    %v646 = vpack.c.b16 %v402, %v400
    %v647 = vpack.c.b16 %v405, %v403
    %v648 = vpack.c.b16 %v406, %v404
    %v649 = vpack.c.b16 %v409, %v407
    %v650 = vpack.c.b16 %v410, %v408
    %v651 = vpack.c.b16 %v413, %v411
    %v652 = vpack.c.b16 %v414, %v412
    %v653 = vpack.c.b16 %v417, %v415
    %v654 = vpack.c.b16 %v418, %v416
    %v655 = vpack.c.b16 %v421, %v419
    %v656 = vpack.c.b16 %v422, %v420
    %v657 = vpack.c.b16 %v425, %v423
    %v658 = vpack.c.b16 %v426, %v424
    %v659 = vpack.c.b16 %v429, %v427
    %v660 = vpack.c.b16 %v430, %v428
    %v661 = vpack.c.b16 %v433, %v431
    %v662 = vpack.c.b16 %v434, %v432
    %v663 = vpack.c.b16 %v437, %v435
    %v664 = vpack.c.b16 %v438, %v436
    %v665 = vpack.c.b16 %v441, %v439
    %v666 = vpack.c.b16 %v442, %v440
    %v667 = vpack.c.b16 %v445, %v443
    %v668 = vpack.c.b16 %v446, %v444
    %v669 = vpack.c.b16 %v449, %v447
    %v670 = vpack.c.b16 %v450, %v448
    %v671 = vpack.c.b16 %v453, %v451
    %v672 = vpack.c.b16 %v454, %v452
    %v673 = vpack.c.b16 %v457, %v455
    %v674 = vpack.c.b16 %v458, %v456
    %v675 = vpack.c.b16 %v461, %v459
    %v676 = vpack.c.b16 %v462, %v460
    %v677 = vpack.c.b16 %v465, %v463
    %v678 = vpack.c.b16 %v466, %v464
    %v679 = vpack.c.b16 %v469, %v467
    %v680 = vpack.c.b16 %v470, %v468
    %v681 = vpack.c.b16 %v473, %v471
    %v682 = vpack.c.b16 %v474, %v472
    %v683 = vpack.c.b16 %v477, %v475
    %v684 = vpack.c.b16 %v478, %v476
    %v685 = vpack.c.b16 %v481, %v479
    %v686 = vpack.c.b16 %v482, %v480
    %v687 = vpack.c.b16 %v485, %v483
    %v688 = vpack.c.b16 %v486, %v484
    %v689 = vpack.c.b16 %v489, %v487
    %v690 = vpack.c.b16 %v490, %v488
    %v691 = vpack.c.b16 %v493, %v491
    %v692 = vpack.c.b16 %v494, %v492
    %v693 = vpack.c.b16 %v497, %v495
    %v694 = vpack.c.b16 %v498, %v496
    %v695 = vpack.c.b16 %v501, %v499
    %v696 = vpack.c.b16 %v502, %v500
    %v697 = vpack.c.b16 %v505, %v503
    %v698 = vpack.c.b16 %v506, %v504
    %v699 = vpack.c.b16 %v509, %v507
    %v700 = vpack.c.b16 %v510, %v508
    %v701 = vpack.c.b16 %v513, %v511
    %v702 = vpack.c.b16 %v514, %v512
    %v703 = vpack.c.b16 %v517, %v515
    %v704 = vpack.c.b16 %v518, %v516
    %v705 = vpack.c.b16 %v521, %v519
    %v706 = vpack.c.b16 %v522, %v520
    %v707 = vpack.c.b16 %v525, %v523
    %v708 = vpack.c.b16 %v526, %v524
    %v709 = vpack.c.b16 %v529, %v527
    %v710 = vpack.c.b16 %v530, %v528
    %v711 = vpack.c.b16 %v533, %v531
    %v712 = vpack.c.b16 %v534, %v532
    %v713 = vpack.c.b16 %v537, %v535
    %v714 = vpack.c.b16 %v538, %v536
    %v715 = vpack.c.b16 %v541, %v539
    %v716 = vpack.c.b16 %v542, %v540
    %v717 = vpack.c.b16 %v545, %v543
    %v718 = vpack.c.b16 %v546, %v544
    %v719 = vpack.c.b16 %v549, %v547
    %v720 = vpack.c.b16 %v550, %v548
    %v721 = vpack.c.b16 %v553, %v551
    %v722 = vpack.c.b16 %v554, %v552
    %v723 = vpack.c.b16 %v557, %v555
    %v724 = vpack.c.b16 %v558, %v556
    %v725 = vpack.c.b16 %v561, %v559
    %v726 = vpack.c.b16 %v562, %v560
    %v727 = vpack.c.b16 %v565, %v563
    %v728 = vpack.c.b16 %v566, %v564
    %v729 = vpack.c.b16 %v569, %v567
    %v730 = vpack.c.b16 %v570, %v568
    %v731 = vpack.c.b16 %v573, %v571
    %v732 = vpack.c.b16 %v574, %v572
    %v733 = vpack.c.b16 %v577, %v575
    %v734 = vpack.c.b16 %v578, %v576
    %v735 = vpack.c.b16 %v581, %v579
    %v736 = vpack.c.b16 %v582, %v580
    %v737 = vpack.c.b16 %v585, %v583
    %v738 = vpack.c.b16 %v586, %v584
    %v739 = vpack.c.b16 %v589, %v587
    %v740 = vpack.c.b16 %v590, %v588
    %v741 = vpack.c.b16 %v593, %v591
    %v742 = vpack.c.b16 %v594, %v592
    %v743 = vpack.c.b16 %v597, %v595
    %v744 = vpack.c.b16 %v598, %v596
    %v745 = vpack.c.b16 %v601, %v599
    %v746 = vpack.c.b16 %v602, %v600
    %v747 = vpack.c.b16 %v605, %v603
    %v748 = vpack.c.b16 %v606, %v604
    %v749 = vpack.c.b16 %v609, %v607
    %v750 = vpack.c.b16 %v610, %v608
    %v751 = vpack.c.b16 %v613, %v611
    %v752 = vpack.c.b16 %v614, %v612
    %v753 = vpack.c.b16 %v617, %v615
    %v754 = vpack.c.b16 %v618, %v616
    %v755 = vpack.c.b16 %v621, %v619
    %v756 = vpack.c.b16 %v622, %v620
    %v757 = vpack.c.b16 %v625, %v623
    %v758 = vpack.c.b16 %v626, %v624
    %v759 = vpack.c.b16 %v629, %v627
    %v760 = vpack.c.b16 %v630, %v628
    %v761 = vpack.c.b16 %v633, %v631
    %v762 = vpack.c.b16 %v634, %v632
    %891 = vmatpush.bf16.msra.mxu0 %v649
    %892 = vmatpush.bf16.msra.mxu0 %v647
    %893 = vmatpush.bf16.msra.mxu0 %v645
    %894 = vmatpush.bf16.msra.mxu0 %v643
    %895 = vmatpush.bf16.msra.mxu0 %v641
    %896 = vmatpush.bf16.msra.mxu0 %v639
    %897 = vmatpush.bf16.msra.mxu0 %v637
    %898 = vmatpush.bf16.msra.mxu0 %v635
    %899 = vmatmul.bf16.gmra.mxu0 %v109
    %v900 = vpop.f32.mrf.mxu0
    %v901 = vadd.f32 %v247, %v900
    %v902 = vpop.f32.mrf.mxu0
    %v903 = vadd.f32 %v247, %v902
    %904 = vdwg.mxu0
    %905 = vmatpush.bf16.msra.mxu0 %v665
    %906 = vmatpush.bf16.msra.mxu0 %v663
    %907 = vmatpush.bf16.msra.mxu0 %v661
    %908 = vmatpush.bf16.msra.mxu0 %v659
    %909 = vmatpush.bf16.msra.mxu0 %v657
    %910 = vmatpush.bf16.msra.mxu0 %v655
    %911 = vmatpush.bf16.msra.mxu0 %v653
    %912 = vmatpush.bf16.msra.mxu0 %v651
    %913 = vmatmul.bf16.gmra.mxu0 %v110
    %v914 = vpop.f32.mrf.mxu0
    %v915 = vadd.f32 %v901, %v914
    %v916 = vpop.f32.mrf.mxu0
    %v917 = vadd.f32 %v903, %v916
    %918 = vdwg.mxu0
    %919 = vmatpush.bf16.msra.mxu0 %v681
    %920 = vmatpush.bf16.msra.mxu0 %v679
    %921 = vmatpush.bf16.msra.mxu0 %v677
    %922 = vmatpush.bf16.msra.mxu0 %v675
    %923 = vmatpush.bf16.msra.mxu0 %v673
    %924 = vmatpush.bf16.msra.mxu0 %v671
    %925 = vmatpush.bf16.msra.mxu0 %v669
    %926 = vmatpush.bf16.msra.mxu0 %v667
    %927 = vmatmul.bf16.gmra.mxu0 %v111
    %v928 = vpop.f32.mrf.mxu0
    %v929 = vadd.f32 %v915, %v928
    %v930 = vpop.f32.mrf.mxu0
    %v931 = vadd.f32 %v917, %v930
    %932 = vdwg.mxu0
    %933 = vmatpush.bf16.msra.mxu0 %v697
    %934 = vmatpush.bf16.msra.mxu0 %v695
    %935 = vmatpush.bf16.msra.mxu0 %v693
    %936 = vmatpush.bf16.msra.mxu0 %v691
    %937 = vmatpush.bf16.msra.mxu0 %v689
    %938 = vmatpush.bf16.msra.mxu0 %v687
    %939 = vmatpush.bf16.msra.mxu0 %v685
    %940 = vmatpush.bf16.msra.mxu0 %v683
    %941 = vmatmul.bf16.gmra.mxu0 %v112
    %v942 = vpop.f32.mrf.mxu0
    %v943 = vadd.f32 %v929, %v942
    %v944 = vpop.f32.mrf.mxu0
    %v945 = vadd.f32 %v931, %v944
    %946 = vdwg.mxu0
    %947 = vmatpush.bf16.msra.mxu0 %v713
    %948 = vmatpush.bf16.msra.mxu0 %v711
    %949 = vmatpush.bf16.msra.mxu0 %v709
    %950 = vmatpush.bf16.msra.mxu0 %v707
    %951 = vmatpush.bf16.msra.mxu0 %v705
    %952 = vmatpush.bf16.msra.mxu0 %v703
    %953 = vmatpush.bf16.msra.mxu0 %v701
    %954 = vmatpush.bf16.msra.mxu0 %v699
    %955 = vmatmul.bf16.gmra.mxu0 %v113
    %v956 = vpop.f32.mrf.mxu0
    %v957 = vadd.f32 %v943, %v956
    %v958 = vpop.f32.mrf.mxu0
    %v959 = vadd.f32 %v945, %v958
    %960 = vdwg.mxu0
    %961 = vmatpush.bf16.msra.mxu0 %v729
    %962 = vmatpush.bf16.msra.mxu0 %v727
    %963 = vmatpush.bf16.msra.mxu0 %v725
    %964 = vmatpush.bf16.msra.mxu0 %v723
    %965 = vmatpush.bf16.msra.mxu0 %v721
    %966 = vmatpush.bf16.msra.mxu0 %v719
    %967 = vmatpush.bf16.msra.mxu0 %v717
    %968 = vmatpush.bf16.msra.mxu0 %v715
    %969 = vmatmul.bf16.gmra.mxu0 %v114
    %v970 = vpop.f32.mrf.mxu0
    %v971 = vadd.f32 %v957, %v970
    %v972 = vpop.f32.mrf.mxu0
    %v973 = vadd.f32 %v959, %v972
    %974 = vdwg.mxu0
    %975 = vmatpush.bf16.msra.mxu0 %v745
    %976 = vmatpush.bf16.msra.mxu0 %v743
    %977 = vmatpush.bf16.msra.mxu0 %v741
    %978 = vmatpush.bf16.msra.mxu0 %v739
    %979 = vmatpush.bf16.msra.mxu0 %v737
    %980 = vmatpush.bf16.msra.mxu0 %v735
    %981 = vmatpush.bf16.msra.mxu0 %v733
    %982 = vmatpush.bf16.msra.mxu0 %v731
    %983 = vmatmul.bf16.gmra.mxu0 %v115
    %v984 = vpop.f32.mrf.mxu0
    %v985 = vadd.f32 %v971, %v984
    %v986 = vpop.f32.mrf.mxu0
    %v987 = vadd.f32 %v973, %v986
    %988 = vdwg.mxu0
    %989 = vmatpush.bf16.msra.mxu0 %v761
    %990 = vmatpush.bf16.msra.mxu0 %v759
    %991 = vmatpush.bf16.msra.mxu0 %v757
    %992 = vmatpush.bf16.msra.mxu0 %v755
    %993 = vmatpush.bf16.msra.mxu0 %v753
    %994 = vmatpush.bf16.msra.mxu0 %v751
    %995 = vmatpush.bf16.msra.mxu0 %v749
    %996 = vmatpush.bf16.msra.mxu0 %v747
    %997 = vmatmul.bf16.gmra.mxu0 %v116
    %v998 = vpop.f32.mrf.mxu0
    %v999 = vadd.f32 %v985, %v998
    %v1000 = vpop.f32.mrf.mxu0
    %v1001 = vadd.f32 %v987, %v1000
    %1002 = vdwg.mxu0
    %1003 = vmatpush.bf16.msra.mxu0 %v650
    %1004 = vmatpush.bf16.msra.mxu0 %v648
    %1005 = vmatpush.bf16.msra.mxu0 %v646
    %1006 = vmatpush.bf16.msra.mxu0 %v644
    %1007 = vmatpush.bf16.msra.mxu0 %v642
    %1008 = vmatpush.bf16.msra.mxu0 %v640
    %1009 = vmatpush.bf16.msra.mxu0 %v638
    %1010 = vmatpush.bf16.msra.mxu0 %v636
    %1011 = vmatmul.bf16.gmra.mxu0 %v109
    %v1012 = vpop.f32.mrf.mxu0
    %v1013 = vadd.f32 %v248, %v1012
    %v1014 = vpop.f32.mrf.mxu0
    %v1015 = vadd.f32 %v248, %v1014
    %1016 = vdwg.mxu0
    %1017 = vmatpush.bf16.msra.mxu0 %v666
    %1018 = vmatpush.bf16.msra.mxu0 %v664
    %1019 = vmatpush.bf16.msra.mxu0 %v662
    %1020 = vmatpush.bf16.msra.mxu0 %v660
    %1021 = vmatpush.bf16.msra.mxu0 %v658
    %1022 = vmatpush.bf16.msra.mxu0 %v656
    %1023 = vmatpush.bf16.msra.mxu0 %v654
    %1024 = vmatpush.bf16.msra.mxu0 %v652
    %1025 = vmatmul.bf16.gmra.mxu0 %v110
    %v1026 = vpop.f32.mrf.mxu0
    %v1027 = vadd.f32 %v1013, %v1026
    %v1028 = vpop.f32.mrf.mxu0
    %v1029 = vadd.f32 %v1015, %v1028
    %1030 = vdwg.mxu0
    %1031 = vmatpush.bf16.msra.mxu0 %v682
    %1032 = vmatpush.bf16.msra.mxu0 %v680
    %1033 = vmatpush.bf16.msra.mxu0 %v678
    %1034 = vmatpush.bf16.msra.mxu0 %v676
    %1035 = vmatpush.bf16.msra.mxu0 %v674
    %1036 = vmatpush.bf16.msra.mxu0 %v672
    %1037 = vmatpush.bf16.msra.mxu0 %v670
    %1038 = vmatpush.bf16.msra.mxu0 %v668
    %1039 = vmatmul.bf16.gmra.mxu0 %v111
    %v1040 = vpop.f32.mrf.mxu0
    %v1041 = vadd.f32 %v1027, %v1040
    %v1042 = vpop.f32.mrf.mxu0
    %v1043 = vadd.f32 %v1029, %v1042
    %1044 = vdwg.mxu0
    %1045 = vmatpush.bf16.msra.mxu0 %v698
    %1046 = vmatpush.bf16.msra.mxu0 %v696
    %1047 = vmatpush.bf16.msra.mxu0 %v694
    %1048 = vmatpush.bf16.msra.mxu0 %v692
    %1049 = vmatpush.bf16.msra.mxu0 %v690
    %1050 = vmatpush.bf16.msra.mxu0 %v688
    %1051 = vmatpush.bf16.msra.mxu0 %v686
    %1052 = vmatpush.bf16.msra.mxu0 %v684
    %1053 = vmatmul.bf16.gmra.mxu0 %v112
    %v1054 = vpop.f32.mrf.mxu0
    %v1055 = vadd.f32 %v1041, %v1054
    %v1056 = vpop.f32.mrf.mxu0
    %v1057 = vadd.f32 %v1043, %v1056
    %1058 = vdwg.mxu0
    %1059 = vmatpush.bf16.msra.mxu0 %v714
    %1060 = vmatpush.bf16.msra.mxu0 %v712
    %1061 = vmatpush.bf16.msra.mxu0 %v710
    %1062 = vmatpush.bf16.msra.mxu0 %v708
    %1063 = vmatpush.bf16.msra.mxu0 %v706
    %1064 = vmatpush.bf16.msra.mxu0 %v704
    %1065 = vmatpush.bf16.msra.mxu0 %v702
    %1066 = vmatpush.bf16.msra.mxu0 %v700
    %1067 = vmatmul.bf16.gmra.mxu0 %v113
    %v1068 = vpop.f32.mrf.mxu0
    %v1069 = vadd.f32 %v1055, %v1068
    %v1070 = vpop.f32.mrf.mxu0
    %v1071 = vadd.f32 %v1057, %v1070
    %1072 = vdwg.mxu0
    %1073 = vmatpush.bf16.msra.mxu0 %v730
    %1074 = vmatpush.bf16.msra.mxu0 %v728
    %1075 = vmatpush.bf16.msra.mxu0 %v726
    %1076 = vmatpush.bf16.msra.mxu0 %v724
    %1077 = vmatpush.bf16.msra.mxu0 %v722
    %1078 = vmatpush.bf16.msra.mxu0 %v720
    %1079 = vmatpush.bf16.msra.mxu0 %v718
    %1080 = vmatpush.bf16.msra.mxu0 %v716
    %1081 = vmatmul.bf16.gmra.mxu0 %v114
    %v1082 = vpop.f32.mrf.mxu0
    %v1083 = vadd.f32 %v1069, %v1082
    %v1084 = vpop.f32.mrf.mxu0
    %v1085 = vadd.f32 %v1071, %v1084
    %1086 = vdwg.mxu0
    %1087 = vmatpush.bf16.msra.mxu0 %v746
    %1088 = vmatpush.bf16.msra.mxu0 %v744
    %1089 = vmatpush.bf16.msra.mxu0 %v742
    %1090 = vmatpush.bf16.msra.mxu0 %v740
    %1091 = vmatpush.bf16.msra.mxu0 %v738
    %1092 = vmatpush.bf16.msra.mxu0 %v736
    %1093 = vmatpush.bf16.msra.mxu0 %v734
    %1094 = vmatpush.bf16.msra.mxu0 %v732
    %1095 = vmatmul.bf16.gmra.mxu0 %v115
    %v1096 = vpop.f32.mrf.mxu0
    %v1097 = vadd.f32 %v1083, %v1096
    %v1098 = vpop.f32.mrf.mxu0
    %v1099 = vadd.f32 %v1085, %v1098
    %1100 = vdwg.mxu0
    %1101 = vmatpush.bf16.msra.mxu0 %v762
    %1102 = vmatpush.bf16.msra.mxu0 %v760
    %1103 = vmatpush.bf16.msra.mxu0 %v758
    %1104 = vmatpush.bf16.msra.mxu0 %v756
    %1105 = vmatpush.bf16.msra.mxu0 %v754
    %1106 = vmatpush.bf16.msra.mxu0 %v752
    %1107 = vmatpush.bf16.msra.mxu0 %v750
    %1108 = vmatpush.bf16.msra.mxu0 %v748
    %1109 = vmatmul.bf16.gmra.mxu0 %v116
    %v1110 = vpop.f32.mrf.mxu0
    %v1111 = vadd.f32 %v1097, %v1110
    %v1112 = vpop.f32.mrf.mxu0
    %v1113 = vadd.f32 %v1099, %v1112
    %1114 = vdwg.mxu0
    %v1115 = vpack.c.bf16 %v1001, %v999
    %v1116 = vpack.c.bf16 %v1113, %v1111
    %v1117 = vld [vmem:[%s3] sm:$0xff]
    %v1118 = vld [vmem:[%s3 + $0x8] sm:$0xff]
    %v1119 = vld [vmem:[%s3 + $0x10] sm:$0xff]
    %v1120 = vld [vmem:[%s3 + $0x18] sm:$0xff]
    %v1121 = vld [vmem:[%s3 + $0x20] sm:$0xff]
    %v1122 = vld [vmem:[%s3 + $0x28] sm:$0xff]
    %v1123 = vld [vmem:[%s3 + $0x30] sm:$0xff]
    %v1124 = vld [vmem:[%s3 + $0x38] sm:$0xff]
    %v1125 = vld [vmem:[%s3 + $0x40] sm:$0xff]
    %v1126 = vld [vmem:[%s3 + $0x48] sm:$0xff]
    %v1127 = vld [vmem:[%s3 + $0x50] sm:$0xff]
    %v1128 = vld [vmem:[%s3 + $0x58] sm:$0xff]
    %v1129 = vld [vmem:[%s3 + $0x60] sm:$0xff]
    %v1130 = vld [vmem:[%s3 + $0x68] sm:$0xff]
    %v1131 = vld [vmem:[%s3 + $0x70] sm:$0xff]
    %v1132 = vld [vmem:[%s3 + $0x78] sm:$0xff]
    %v1133 = vld [vmem:[%s3 + $0x80] sm:$0xff]
    %v1134 = vld [vmem:[%s3 + $0x88] sm:$0xff]
    %v1135 = vld [vmem:[%s3 + $0x90] sm:$0xff]
    %v1136 = vld [vmem:[%s3 + $0x98] sm:$0xff]
    %v1137 = vld [vmem:[%s3 + $0xa0] sm:$0xff]
    %v1138 = vld [vmem:[%s3 + $0xa8] sm:$0xff]
    %v1139 = vld [vmem:[%s3 + $0xb0] sm:$0xff]
    %v1140 = vld [vmem:[%s3 + $0xb8] sm:$0xff]
    %v1141 = vld [vmem:[%s3 + $0xc0] sm:$0xff]
    %v1142 = vld [vmem:[%s3 + $0xc8] sm:$0xff]
    %v1143 = vld [vmem:[%s3 + $0xd0] sm:$0xff]
    %v1144 = vld [vmem:[%s3 + $0xd8] sm:$0xff]
    %v1145 = vld [vmem:[%s3 + $0xe0] sm:$0xff]
    %v1146 = vld [vmem:[%s3 + $0xe8] sm:$0xff]
    %v1147 = vld [vmem:[%s3 + $0xf0] sm:$0xff]
    %v1148 = vld [vmem:[%s3 + $0xf8] sm:$0xff]
    %v1149 = vld [vmem:[%s3 + $0x100] sm:$0xff]
    %v1150 = vld [vmem:[%s3 + $0x108] sm:$0xff]
    %v1151 = vld [vmem:[%s3 + $0x110] sm:$0xff]
    %v1152 = vld [vmem:[%s3 + $0x118] sm:$0xff]
    %v1153 = vld [vmem:[%s3 + $0x120] sm:$0xff]
    %v1154 = vld [vmem:[%s3 + $0x128] sm:$0xff]
    %v1155 = vld [vmem:[%s3 + $0x130] sm:$0xff]
    %v1156 = vld [vmem:[%s3 + $0x138] sm:$0xff]
    %v1157 = vld [vmem:[%s3 + $0x140] sm:$0xff]
    %v1158 = vld [vmem:[%s3 + $0x148] sm:$0xff]
    %v1159 = vld [vmem:[%s3 + $0x150] sm:$0xff]
    %v1160 = vld [vmem:[%s3 + $0x158] sm:$0xff]
    %v1161 = vld [vmem:[%s3 + $0x160] sm:$0xff]
    %v1162 = vld [vmem:[%s3 + $0x168] sm:$0xff]
    %v1163 = vld [vmem:[%s3 + $0x170] sm:$0xff]
    %v1164 = vld [vmem:[%s3 + $0x178] sm:$0xff]
    %v1165 = vld [vmem:[%s3 + $0x180] sm:$0xff]
    %v1166 = vld [vmem:[%s3 + $0x188] sm:$0xff]
    %v1167 = vld [vmem:[%s3 + $0x190] sm:$0xff]
    %v1168 = vld [vmem:[%s3 + $0x198] sm:$0xff]
    %v1169 = vld [vmem:[%s3 + $0x1a0] sm:$0xff]
    %v1170 = vld [vmem:[%s3 + $0x1a8] sm:$0xff]
    %v1171 = vld [vmem:[%s3 + $0x1b0] sm:$0xff]
    %v1172 = vld [vmem:[%s3 + $0x1b8] sm:$0xff]
    %v1173 = vld [vmem:[%s3 + $0x1c0] sm:$0xff]
    %v1174 = vld [vmem:[%s3 + $0x1c8] sm:$0xff]
    %v1175 = vld [vmem:[%s3 + $0x1d0] sm:$0xff]
    %v1176 = vld [vmem:[%s3 + $0x1d8] sm:$0xff]
    %v1177 = vld [vmem:[%s3 + $0x1e0] sm:$0xff]
    %v1178 = vld [vmem:[%s3 + $0x1e8] sm:$0xff]
    %v1179 = vld [vmem:[%s3 + $0x1f0] sm:$0xff]
    %v1180 = vld [vmem:[%s3 + $0x1f8] sm:$0xff]
    %s1181 = scalar_lea.vmem [#allocation8], 1
    %v1182 = vld [vmem:[%s1181] ss:$8 sm:$0xf]
    %v1184 = vperm.slane %v1182, 0
    %v1185 = vperm.slane %v1182, 1
    %v1186 = vperm.slane %v1182, 2
    %v1187 = vperm.slane %v1182, 3
    %v1256 = vunpack.c.l.b16 %v1117
    %v1257 = vunpack.c.h.b16 %v1117
    %v1258 = vunpack.c.l.b16 %v1118
    %v1259 = vunpack.c.h.b16 %v1118
    %v1260 = vunpack.c.l.b16 %v1119
    %v1261 = vunpack.c.h.b16 %v1119
    %v1262 = vunpack.c.l.b16 %v1120
    %v1263 = vunpack.c.h.b16 %v1120
    %v1264 = vunpack.c.l.b16 %v1121
    %v1265 = vunpack.c.h.b16 %v1121
    %v1266 = vunpack.c.l.b16 %v1122
    %v1267 = vunpack.c.h.b16 %v1122
    %v1268 = vunpack.c.l.b16 %v1123
    %v1269 = vunpack.c.h.b16 %v1123
    %v1270 = vunpack.c.l.b16 %v1124
    %v1271 = vunpack.c.h.b16 %v1124
    %v1272 = vunpack.c.l.b16 %v1125
    %v1273 = vunpack.c.h.b16 %v1125
    %v1274 = vunpack.c.l.b16 %v1126
    %v1275 = vunpack.c.h.b16 %v1126
    %v1276 = vunpack.c.l.b16 %v1127
    %v1277 = vunpack.c.h.b16 %v1127
    %v1278 = vunpack.c.l.b16 %v1128
    %v1279 = vunpack.c.h.b16 %v1128
    %v1280 = vunpack.c.l.b16 %v1129
    %v1281 = vunpack.c.h.b16 %v1129
    %v1282 = vunpack.c.l.b16 %v1130
    %v1283 = vunpack.c.h.b16 %v1130
    %v1284 = vunpack.c.l.b16 %v1131
    %v1285 = vunpack.c.h.b16 %v1131
    %v1286 = vunpack.c.l.b16 %v1132
    %v1287 = vunpack.c.h.b16 %v1132
    %v1288 = vunpack.c.l.b16 %v1133
    %v1289 = vunpack.c.h.b16 %v1133
    %v1290 = vunpack.c.l.b16 %v1134
    %v1291 = vunpack.c.h.b16 %v1134
    %v1292 = vunpack.c.l.b16 %v1135
    %v1293 = vunpack.c.h.b16 %v1135
    %v1294 = vunpack.c.l.b16 %v1136
    %v1295 = vunpack.c.h.b16 %v1136
    %v1296 = vunpack.c.l.b16 %v1137
    %v1297 = vunpack.c.h.b16 %v1137
    %v1298 = vunpack.c.l.b16 %v1138
    %v1299 = vunpack.c.h.b16 %v1138
    %v1300 = vunpack.c.l.b16 %v1139
    %v1301 = vunpack.c.h.b16 %v1139
    %v1302 = vunpack.c.l.b16 %v1140
    %v1303 = vunpack.c.h.b16 %v1140
    %v1304 = vunpack.c.l.b16 %v1141
    %v1305 = vunpack.c.h.b16 %v1141
    %v1306 = vunpack.c.l.b16 %v1142
    %v1307 = vunpack.c.h.b16 %v1142
    %v1308 = vunpack.c.l.b16 %v1143
    %v1309 = vunpack.c.h.b16 %v1143
    %v1310 = vunpack.c.l.b16 %v1144
    %v1311 = vunpack.c.h.b16 %v1144
    %v1312 = vunpack.c.l.b16 %v1145
    %v1313 = vunpack.c.h.b16 %v1145
    %v1314 = vunpack.c.l.b16 %v1146
    %v1315 = vunpack.c.h.b16 %v1146
    %v1316 = vunpack.c.l.b16 %v1147
    %v1317 = vunpack.c.h.b16 %v1147
    %v1318 = vunpack.c.l.b16 %v1148
    %v1319 = vunpack.c.h.b16 %v1148
    %v1320 = vunpack.c.l.b16 %v1149
    %v1321 = vunpack.c.h.b16 %v1149
    %v1322 = vunpack.c.l.b16 %v1150
    %v1323 = vunpack.c.h.b16 %v1150
    %v1324 = vunpack.c.l.b16 %v1151
    %v1325 = vunpack.c.h.b16 %v1151
    %v1326 = vunpack.c.l.b16 %v1152
    %v1327 = vunpack.c.h.b16 %v1152
    %v1328 = vunpack.c.l.b16 %v1153
    %v1329 = vunpack.c.h.b16 %v1153
    %v1330 = vunpack.c.l.b16 %v1154
    %v1331 = vunpack.c.h.b16 %v1154
    %v1332 = vunpack.c.l.b16 %v1155
    %v1333 = vunpack.c.h.b16 %v1155
    %v1334 = vunpack.c.l.b16 %v1156
    %v1335 = vunpack.c.h.b16 %v1156
    %v1336 = vunpack.c.l.b16 %v1157
    %v1337 = vunpack.c.h.b16 %v1157
    %v1338 = vunpack.c.l.b16 %v1158
    %v1339 = vunpack.c.h.b16 %v1158
    %v1340 = vunpack.c.l.b16 %v1159
    %v1341 = vunpack.c.h.b16 %v1159
    %v1342 = vunpack.c.l.b16 %v1160
    %v1343 = vunpack.c.h.b16 %v1160
    %v1344 = vunpack.c.l.b16 %v1161
    %v1345 = vunpack.c.h.b16 %v1161
    %v1346 = vunpack.c.l.b16 %v1162
    %v1347 = vunpack.c.h.b16 %v1162
    %v1348 = vunpack.c.l.b16 %v1163
    %v1349 = vunpack.c.h.b16 %v1163
    %v1350 = vunpack.c.l.b16 %v1164
    %v1351 = vunpack.c.h.b16 %v1164
    %v1352 = vunpack.c.l.b16 %v1165
    %v1353 = vunpack.c.h.b16 %v1165
    %v1354 = vunpack.c.l.b16 %v1166
    %v1355 = vunpack.c.h.b16 %v1166
    %v1356 = vunpack.c.l.b16 %v1167
    %v1357 = vunpack.c.h.b16 %v1167
    %v1358 = vunpack.c.l.b16 %v1168
    %v1359 = vunpack.c.h.b16 %v1168
    %v1360 = vunpack.c.l.b16 %v1169
    %v1361 = vunpack.c.h.b16 %v1169
    %v1362 = vunpack.c.l.b16 %v1170
    %v1363 = vunpack.c.h.b16 %v1170
    %v1364 = vunpack.c.l.b16 %v1171
    %v1365 = vunpack.c.h.b16 %v1171
    %v1366 = vunpack.c.l.b16 %v1172
    %v1367 = vunpack.c.h.b16 %v1172
    %v1368 = vunpack.c.l.b16 %v1173
    %v1369 = vunpack.c.h.b16 %v1173
    %v1370 = vunpack.c.l.b16 %v1174
    %v1371 = vunpack.c.h.b16 %v1174
    %v1372 = vunpack.c.l.b16 %v1175
    %v1373 = vunpack.c.h.b16 %v1175
    %v1374 = vunpack.c.l.b16 %v1176
    %v1375 = vunpack.c.h.b16 %v1176
    %v1376 = vunpack.c.l.b16 %v1177
    %v1377 = vunpack.c.h.b16 %v1177
    %v1378 = vunpack.c.l.b16 %v1178
    %v1379 = vunpack.c.h.b16 %v1178
    %v1380 = vunpack.c.l.b16 %v1179
    %v1381 = vunpack.c.h.b16 %v1179
    %v1382 = vunpack.c.l.b16 %v1180
    %v1383 = vunpack.c.h.b16 %v1180
    %v1384 = vpack.c.b16 %v1260, %v1256
    %v1385 = vpack.c.b16 %v1261, %v1257
    %v1386 = vpack.c.b16 %v1262, %v1258
    %v1387 = vpack.c.b16 %v1263, %v1259
    %v1388 = vpack.c.b16 %v1268, %v1264
    %v1389 = vpack.c.b16 %v1269, %v1265
    %v1390 = vpack.c.b16 %v1270, %v1266
    %v1391 = vpack.c.b16 %v1271, %v1267
    %v1392 = vpack.c.b16 %v1276, %v1272
    %v1393 = vpack.c.b16 %v1277, %v1273
    %v1394 = vpack.c.b16 %v1278, %v1274
    %v1395 = vpack.c.b16 %v1279, %v1275
    %v1396 = vpack.c.b16 %v1284, %v1280
    %v1397 = vpack.c.b16 %v1285, %v1281
    %v1398 = vpack.c.b16 %v1286, %v1282
    %v1399 = vpack.c.b16 %v1287, %v1283
    %v1400 = vpack.c.b16 %v1292, %v1288
    %v1401 = vpack.c.b16 %v1293, %v1289
    %v1402 = vpack.c.b16 %v1294, %v1290
    %v1403 = vpack.c.b16 %v1295, %v1291
    %v1404 = vpack.c.b16 %v1300, %v1296
    %v1405 = vpack.c.b16 %v1301, %v1297
    %v1406 = vpack.c.b16 %v1302, %v1298
    %v1407 = vpack.c.b16 %v1303, %v1299
    %v1408 = vpack.c.b16 %v1308, %v1304
    %v1409 = vpack.c.b16 %v1309, %v1305
    %v1410 = vpack.c.b16 %v1310, %v1306
    %v1411 = vpack.c.b16 %v1311, %v1307
    %v1412 = vpack.c.b16 %v1316, %v1312
    %v1413 = vpack.c.b16 %v1317, %v1313
    %v1414 = vpack.c.b16 %v1318, %v1314
    %v1415 = vpack.c.b16 %v1319, %v1315
    %v1416 = vpack.c.b16 %v1324, %v1320
    %v1417 = vpack.c.b16 %v1325, %v1321
    %v1418 = vpack.c.b16 %v1326, %v1322
    %v1419 = vpack.c.b16 %v1327, %v1323
    %v1420 = vpack.c.b16 %v1332, %v1328
    %v1421 = vpack.c.b16 %v1333, %v1329
    %v1422 = vpack.c.b16 %v1334, %v1330
    %v1423 = vpack.c.b16 %v1335, %v1331
    %v1424 = vpack.c.b16 %v1340, %v1336
    %v1425 = vpack.c.b16 %v1341, %v1337
    %v1426 = vpack.c.b16 %v1342, %v1338
    %v1427 = vpack.c.b16 %v1343, %v1339
    %v1428 = vpack.c.b16 %v1348, %v1344
    %v1429 = vpack.c.b16 %v1349, %v1345
    %v1430 = vpack.c.b16 %v1350, %v1346
    %v1431 = vpack.c.b16 %v1351, %v1347
    %v1432 = vpack.c.b16 %v1356, %v1352
    %v1433 = vpack.c.b16 %v1357, %v1353
    %v1434 = vpack.c.b16 %v1358, %v1354
    %v1435 = vpack.c.b16 %v1359, %v1355
    %v1436 = vpack.c.b16 %v1364, %v1360
    %v1437 = vpack.c.b16 %v1365, %v1361
    %v1438 = vpack.c.b16 %v1366, %v1362
    %v1439 = vpack.c.b16 %v1367, %v1363
    %v1440 = vpack.c.b16 %v1372, %v1368
    %v1441 = vpack.c.b16 %v1373, %v1369
    %v1442 = vpack.c.b16 %v1374, %v1370
    %v1443 = vpack.c.b16 %v1375, %v1371
    %v1444 = vpack.c.b16 %v1380, %v1376
    %v1445 = vpack.c.b16 %v1381, %v1377
    %v1446 = vpack.c.b16 %v1382, %v1378
    %v1447 = vpack.c.b16 %v1383, %v1379
    %1512 = vmatpush.bf16.msra.mxu0 %v1412
    %1513 = vmatpush.bf16.msra.mxu0 %v1408
    %1514 = vmatpush.bf16.msra.mxu0 %v1404
    %1515 = vmatpush.bf16.msra.mxu0 %v1400
    %1516 = vmatpush.bf16.msra.mxu0 %v1396
    %1517 = vmatpush.bf16.msra.mxu0 %v1392
    %1518 = vmatpush.bf16.msra.mxu0 %v1388
    %1519 = vmatpush.bf16.msra.mxu0 %v1384
    %1520 = vmatmul.bf16.gmra.mxu0 %v1115
    %v1521 = vpop.f32.mrf.mxu0
    %v1522 = vadd.f32 %v1184, %v1521
    %v1523 = vpop.f32.mrf.mxu0
    %v1524 = vadd.f32 %v1184, %v1523
    %1525 = vdwg.mxu0
    %1526 = vmatpush.bf16.msra.mxu0 %v1444
    %1527 = vmatpush.bf16.msra.mxu0 %v1440
    %1528 = vmatpush.bf16.msra.mxu0 %v1436
    %1529 = vmatpush.bf16.msra.mxu0 %v1432
    %1530 = vmatpush.bf16.msra.mxu0 %v1428
    %1531 = vmatpush.bf16.msra.mxu0 %v1424
    %1532 = vmatpush.bf16.msra.mxu0 %v1420
    %1533 = vmatpush.bf16.msra.mxu0 %v1416
    %1534 = vmatmul.bf16.gmra.mxu0 %v1116
    %v1535 = vpop.f32.mrf.mxu0
    %v1536 = vadd.f32 %v1522, %v1535
    %v1537 = vpop.f32.mrf.mxu0
    %v1538 = vadd.f32 %v1524, %v1537
    %1539 = vdwg.mxu0
    %1540 = vmatpush.bf16.msra.mxu0 %v1413
    %1541 = vmatpush.bf16.msra.mxu0 %v1409
    %1542 = vmatpush.bf16.msra.mxu0 %v1405
    %1543 = vmatpush.bf16.msra.mxu0 %v1401
    %1544 = vmatpush.bf16.msra.mxu0 %v1397
    %1545 = vmatpush.bf16.msra.mxu0 %v1393
    %1546 = vmatpush.bf16.msra.mxu0 %v1389
    %1547 = vmatpush.bf16.msra.mxu0 %v1385
    %1548 = vmatmul.bf16.gmra.mxu0 %v1115
    %v1549 = vpop.f32.mrf.mxu0
    %v1550 = vadd.f32 %v1185, %v1549
    %v1551 = vpop.f32.mrf.mxu0
    %v1552 = vadd.f32 %v1185, %v1551
    %1553 = vdwg.mxu0
    %1554 = vmatpush.bf16.msra.mxu0 %v1445
    %1555 = vmatpush.bf16.msra.mxu0 %v1441
    %1556 = vmatpush.bf16.msra.mxu0 %v1437
    %1557 = vmatpush.bf16.msra.mxu0 %v1433
    %1558 = vmatpush.bf16.msra.mxu0 %v1429
    %1559 = vmatpush.bf16.msra.mxu0 %v1425
    %1560 = vmatpush.bf16.msra.mxu0 %v1421
    %1561 = vmatpush.bf16.msra.mxu0 %v1417
    %1562 = vmatmul.bf16.gmra.mxu0 %v1116
    %v1563 = vpop.f32.mrf.mxu0
    %v1564 = vadd.f32 %v1550, %v1563
    %v1565 = vpop.f32.mrf.mxu0
    %v1566 = vadd.f32 %v1552, %v1565
    %1567 = vdwg.mxu0
    %1568 = vmatpush.bf16.msra.mxu0 %v1414
    %1569 = vmatpush.bf16.msra.mxu0 %v1410
    %1570 = vmatpush.bf16.msra.mxu0 %v1406
    %1571 = vmatpush.bf16.msra.mxu0 %v1402
    %1572 = vmatpush.bf16.msra.mxu0 %v1398
    %1573 = vmatpush.bf16.msra.mxu0 %v1394
    %1574 = vmatpush.bf16.msra.mxu0 %v1390
    %1575 = vmatpush.bf16.msra.mxu0 %v1386
    %1576 = vmatmul.bf16.gmra.mxu0 %v1115
    %v1577 = vpop.f32.mrf.mxu0
    %v1578 = vadd.f32 %v1186, %v1577
    %v1579 = vpop.f32.mrf.mxu0
    %v1580 = vadd.f32 %v1186, %v1579
    %1581 = vdwg.mxu0
    %1582 = vmatpush.bf16.msra.mxu0 %v1446
    %1583 = vmatpush.bf16.msra.mxu0 %v1442
    %1584 = vmatpush.bf16.msra.mxu0 %v1438
    %1585 = vmatpush.bf16.msra.mxu0 %v1434
    %1586 = vmatpush.bf16.msra.mxu0 %v1430
    %1587 = vmatpush.bf16.msra.mxu0 %v1426
    %1588 = vmatpush.bf16.msra.mxu0 %v1422
    %1589 = vmatpush.bf16.msra.mxu0 %v1418
    %1590 = vmatmul.bf16.gmra.mxu0 %v1116
    %v1591 = vpop.f32.mrf.mxu0
    %v1592 = vadd.f32 %v1578, %v1591
    %v1593 = vpop.f32.mrf.mxu0
    %v1594 = vadd.f32 %v1580, %v1593
    %1595 = vdwg.mxu0
    %1596 = vmatpush.bf16.msra.mxu0 %v1415
    %1597 = vmatpush.bf16.msra.mxu0 %v1411
    %1598 = vmatpush.bf16.msra.mxu0 %v1407
    %1599 = vmatpush.bf16.msra.mxu0 %v1403
    %1600 = vmatpush.bf16.msra.mxu0 %v1399
    %1601 = vmatpush.bf16.msra.mxu0 %v1395
    %1602 = vmatpush.bf16.msra.mxu0 %v1391
    %1603 = vmatpush.bf16.msra.mxu0 %v1387
    %1604 = vmatmul.bf16.gmra.mxu0 %v1115
    %v1605 = vpop.f32.mrf.mxu0
    %v1606 = vadd.f32 %v1187, %v1605
    %v1607 = vpop.f32.mrf.mxu0
    %v1608 = vadd.f32 %v1187, %v1607
    %1609 = vdwg.mxu0
    %1610 = vmatpush.bf16.msra.mxu0 %v1447
    %1611 = vmatpush.bf16.msra.mxu0 %v1443
    %1612 = vmatpush.bf16.msra.mxu0 %v1439
    %1613 = vmatpush.bf16.msra.mxu0 %v1435
    %1614 = vmatpush.bf16.msra.mxu0 %v1431
    %1615 = vmatpush.bf16.msra.mxu0 %v1427
    %1616 = vmatpush.bf16.msra.mxu0 %v1423
    %1617 = vmatpush.bf16.msra.mxu0 %v1419
    %1618 = vmatmul.bf16.gmra.mxu0 %v1116
    %v1619 = vpop.f32.mrf.mxu0
    %v1620 = vadd.f32 %v1606, %v1619
    %v1621 = vpop.f32.mrf.mxu0
    %v1622 = vadd.f32 %v1608, %v1621
    %1623 = vdwg.mxu0
    %s1624 = scalar_lea.vmem [#allocation8], 2
    %v1625 = vld [vmem:[%s1624] ss:$8 sm:$0xf]
    %s1626 = scalar_lea.vmem [#allocation8], 3
    %v1627 = vld [vmem:[%s1626] ss:$8 sm:$0xf]
    %v1628 = vlaneseq
    %v1629 = vshrl.u32 %v1628, 7
    %v1630 = vadd.s32 %v1629, 8
    %vm1631 = vcmp.lt.s32.totalorder %v1629, 8
    %vm1632 = vcmp.lt.s32.totalorder %v1630, 8
    %v1633 = vsel %vm1631, %v1536, 0.0
    %v1634 = vsel %vm1631, %v1564, 0.0
    %v1635 = vsel %vm1631, %v1592, 0.0
    %v1636 = vsel %vm1631, %v1620, 0.0
    %v1637 = vsel %vm1632, %v1538, 0.0
    %v1638 = vsel %vm1632, %v1566, 0.0
    %v1639 = vsel %vm1632, %v1594, 0.0
    %v1640 = vsel %vm1632, %v1622, 0.0
    %v1641 = vsub.f32 %v1536, %v1633
    %v1642 = vsub.f32 %v1564, %v1634
    %v1643 = vsub.f32 %v1592, %v1635
    %v1644 = vsub.f32 %v1620, %v1636
    %v1645 = vsub.f32 %v1538, %v1637
    %v1646 = vsub.f32 %v1566, %v1638
    %v1647 = vsub.f32 %v1594, %v1639
    %v1648 = vsub.f32 %v1622, %v1640
    %v1649 = vadd.f32 %v1633, %v1637
    %v1650 = vrot.slane %v1649, 4
    %v1651 = vadd.f32 %v1649, %v1650
    %v1652 = vrot.slane %v1651, 2
    %v1653 = vadd.f32 %v1651, %v1652
    %v1654 = vrot.slane %v1653, 1
    %v1655 = vadd.f32 %v1653, %v1654
    %v1656 = vadd.f32 %v1634, %v1638
    %v1657 = vrot.slane %v1656, 4
    %v1658 = vadd.f32 %v1656, %v1657
    %v1659 = vrot.slane %v1658, 2
    %v1660 = vadd.f32 %v1658, %v1659
    %v1661 = vrot.slane %v1660, 1
    %v1662 = vadd.f32 %v1660, %v1661
    %v1663 = vadd.f32 %v1635, %v1639
    %v1664 = vrot.slane %v1663, 4
    %v1665 = vadd.f32 %v1663, %v1664
    %v1666 = vrot.slane %v1665, 2
    %v1667 = vadd.f32 %v1665, %v1666
    %v1668 = vrot.slane %v1667, 1
    %v1669 = vadd.f32 %v1667, %v1668
    %v1670 = vadd.f32 %v1636, %v1640
    %v1671 = vrot.slane %v1670, 4
    %v1672 = vadd.f32 %v1670, %v1671
    %v1673 = vrot.slane %v1672, 2
    %v1674 = vadd.f32 %v1672, %v1673
    %v1675 = vrot.slane %v1674, 1
    %v1676 = vadd.f32 %v1674, %v1675
    %v1677 = vmul.f32 %v1655, 0.125
    %v1678 = vmul.f32 %v1662, 0.125
    %v1679 = vmul.f32 %v1669, 0.125
    %v1680 = vmul.f32 %v1676, 0.125
    %v1681 = vadd.f32 %v1641, %v1645
    %v1682 = vrot.slane %v1681, 4
    %v1683 = vadd.f32 %v1681, %v1682
    %v1684 = vrot.slane %v1683, 2
    %v1685 = vadd.f32 %v1683, %v1684
    %v1686 = vrot.slane %v1685, 1
    %v1687 = vadd.f32 %v1685, %v1686
    %v1688 = vadd.f32 %v1642, %v1646
    %v1689 = vrot.slane %v1688, 4
    %v1690 = vadd.f32 %v1688, %v1689
    %v1691 = vrot.slane %v1690, 2
    %v1692 = vadd.f32 %v1690, %v1691
    %v1693 = vrot.slane %v1692, 1
    %v1694 = vadd.f32 %v1692, %v1693
    %v1695 = vadd.f32 %v1643, %v1647
    %v1696 = vrot.slane %v1695, 4
    %v1697 = vadd.f32 %v1695, %v1696
    %v1698 = vrot.slane %v1697, 2
    %v1699 = vadd.f32 %v1697, %v1698
    %v1700 = vrot.slane %v1699, 1
    %v1701 = vadd.f32 %v1699, %v1700
    %v1702 = vadd.f32 %v1644, %v1648
    %v1703 = vrot.slane %v1702, 4
    %v1704 = vadd.f32 %v1702, %v1703
    %v1705 = vrot.slane %v1704, 2
    %v1706 = vadd.f32 %v1704, %v1705
    %v1707 = vrot.slane %v1706, 1
    %v1708 = vadd.f32 %v1706, %v1707
    %v1709 = vmul.f32 %v1687, 0.125
    %v1710 = vmul.f32 %v1694, 0.125
    %v1711 = vmul.f32 %v1701, 0.125
    %v1712 = vmul.f32 %v1708, 0.125
    %v1713 = vmul.f32 %v1633, %v1633
    %v1714 = vmul.f32 %v1634, %v1634
    %v1715 = vmul.f32 %v1635, %v1635
    %v1716 = vmul.f32 %v1636, %v1636
    %v1717 = vmul.f32 %v1637, %v1637
    %v1718 = vmul.f32 %v1638, %v1638
    %v1719 = vmul.f32 %v1639, %v1639
    %v1720 = vmul.f32 %v1640, %v1640
    %v1721 = vadd.f32 %v1713, %v1717
    %v1722 = vrot.slane %v1721, 4
    %v1723 = vadd.f32 %v1721, %v1722
    %v1724 = vrot.slane %v1723, 2
    %v1725 = vadd.f32 %v1723, %v1724
    %v1726 = vrot.slane %v1725, 1
    %v1727 = vadd.f32 %v1725, %v1726
    %v1728 = vadd.f32 %v1714, %v1718
    %v1729 = vrot.slane %v1728, 4
    %v1730 = vadd.f32 %v1728, %v1729
    %v1731 = vrot.slane %v1730, 2
    %v1732 = vadd.f32 %v1730, %v1731
    %v1733 = vrot.slane %v1732, 1
    %v1734 = vadd.f32 %v1732, %v1733
    %v1735 = vadd.f32 %v1715, %v1719
    %v1736 = vrot.slane %v1735, 4
    %v1737 = vadd.f32 %v1735, %v1736
    %v1738 = vrot.slane %v1737, 2
    %v1739 = vadd.f32 %v1737, %v1738
    %v1740 = vrot.slane %v1739, 1
    %v1741 = vadd.f32 %v1739, %v1740
    %v1742 = vadd.f32 %v1716, %v1720
    %v1743 = vrot.slane %v1742, 4
    %v1744 = vadd.f32 %v1742, %v1743
    %v1745 = vrot.slane %v1744, 2
    %v1746 = vadd.f32 %v1744, %v1745
    %v1747 = vrot.slane %v1746, 1
    %v1748 = vadd.f32 %v1746, %v1747
    %v1749 = vmul.f32 %v1727, 0.125
    %v1750 = vmul.f32 %v1734, 0.125
    %v1751 = vmul.f32 %v1741, 0.125
    %v1752 = vmul.f32 %v1748, 0.125
    %v1753 = vmul.f32 %v1641, %v1641
    %v1754 = vmul.f32 %v1642, %v1642
    %v1755 = vmul.f32 %v1643, %v1643
    %v1756 = vmul.f32 %v1644, %v1644
    %v1757 = vmul.f32 %v1645, %v1645
    %v1758 = vmul.f32 %v1646, %v1646
    %v1759 = vmul.f32 %v1647, %v1647
    %v1760 = vmul.f32 %v1648, %v1648
    %v1761 = vadd.f32 %v1753, %v1757
    %v1762 = vrot.slane %v1761, 4
    %v1763 = vadd.f32 %v1761, %v1762
    %v1764 = vrot.slane %v1763, 2
    %v1765 = vadd.f32 %v1763, %v1764
    %v1766 = vrot.slane %v1765, 1
    %v1767 = vadd.f32 %v1765, %v1766
    %v1768 = vadd.f32 %v1754, %v1758
    %v1769 = vrot.slane %v1768, 4
    %v1770 = vadd.f32 %v1768, %v1769
    %v1771 = vrot.slane %v1770, 2
    %v1772 = vadd.f32 %v1770, %v1771
    %v1773 = vrot.slane %v1772, 1
    %v1774 = vadd.f32 %v1772, %v1773
    %v1775 = vadd.f32 %v1755, %v1759
    %v1776 = vrot.slane %v1775, 4
    %v1777 = vadd.f32 %v1775, %v1776
    %v1778 = vrot.slane %v1777, 2
    %v1779 = vadd.f32 %v1777, %v1778
    %v1780 = vrot.slane %v1779, 1
    %v1781 = vadd.f32 %v1779, %v1780
    %v1782 = vadd.f32 %v1756, %v1760
    %v1783 = vrot.slane %v1782, 4
    %v1784 = vadd.f32 %v1782, %v1783
    %v1785 = vrot.slane %v1784, 2
    %v1786 = vadd.f32 %v1784, %v1785
    %v1787 = vrot.slane %v1786, 1
    %v1788 = vadd.f32 %v1786, %v1787
    %v1789 = vmul.f32 %v1767, 0.125
    %v1790 = vmul.f32 %v1774, 0.125
    %v1791 = vmul.f32 %v1781, 0.125
    %v1792 = vmul.f32 %v1788, 0.125
    %v1793 = vmul.f32 %v1677, %v1677
    %v1794 = vmul.f32 %v1678, %v1678
    %v1795 = vmul.f32 %v1679, %v1679
    %v1796 = vmul.f32 %v1680, %v1680
    %v1797 = vsub.f32 %v1749, %v1793
    %v1798 = vsub.f32 %v1750, %v1794
    %v1799 = vsub.f32 %v1751, %v1795
    %v1800 = vsub.f32 %v1752, %v1796
    %v1801 = vmax.f32 %v1797, 0.0
    %v1802 = vmax.f32 %v1798, 0.0
    %v1803 = vmax.f32 %v1799, 0.0
    %v1804 = vmax.f32 %v1800, 0.0
    %v1805 = vmul.f32 %v1709, %v1709
    %v1806 = vmul.f32 %v1710, %v1710
    %v1807 = vmul.f32 %v1711, %v1711
    %v1808 = vmul.f32 %v1712, %v1712
    %v1809 = vsub.f32 %v1789, %v1805
    %v1810 = vsub.f32 %v1790, %v1806
    %v1811 = vsub.f32 %v1791, %v1807
    %v1812 = vsub.f32 %v1792, %v1808
    %v1813 = vmax.f32 %v1809, 0.0
    %v1814 = vmax.f32 %v1810, 0.0
    %v1815 = vmax.f32 %v1811, 0.0
    %v1816 = vmax.f32 %v1812, 0.0
    %v1817 = vsel %vm1631, %v1677, %v1709
    %v1818 = vsel %vm1631, %v1678, %v1710
    %v1819 = vsel %vm1631, %v1679, %v1711
    %v1820 = vsel %vm1631, %v1680, %v1712
    %v1821 = vsel %vm1632, %v1677, %v1709
    %v1822 = vsel %vm1632, %v1678, %v1710
    %v1823 = vsel %vm1632, %v1679, %v1711
    %v1824 = vsel %vm1632, %v1680, %v1712
    %v1825 = vsel %vm1631, %v1801, %v1813
    %v1826 = vsel %vm1631, %v1802, %v1814
    %v1827 = vsel %vm1631, %v1803, %v1815
    %v1828 = vsel %vm1631, %v1804, %v1816
    %v1829 = vsel %vm1632, %v1801, %v1813
    %v1830 = vsel %vm1632, %v1802, %v1814
    %v1831 = vsel %vm1632, %v1803, %v1815
    %v1832 = vsel %vm1632, %v1804, %v1816
    %v1833 = vsub.f32 %v1536, %v1817
    %v1834 = vsub.f32 %v1564, %v1818
    %v1835 = vsub.f32 %v1592, %v1819
    %v1836 = vsub.f32 %v1620, %v1820
    %v1837 = vsub.f32 %v1538, %v1821
    %v1838 = vsub.f32 %v1566, %v1822
    %v1839 = vsub.f32 %v1594, %v1823
    %v1840 = vsub.f32 %v1622, %v1824
    %v1841 = vadd.f32 %v1825, 1e-05
    %v1842 = vadd.f32 %v1826, 1e-05
    %v1843 = vadd.f32 %v1827, 1e-05
    %v1844 = vadd.f32 %v1828, 1e-05
    %v1845 = vadd.f32 %v1829, 1e-05
    %v1846 = vadd.f32 %v1830, 1e-05
    %v1847 = vadd.f32 %v1831, 1e-05
    %v1848 = vadd.f32 %v1832, 1e-05
    %v1849 = vrsqrt.pop %v1841
    %v1850 = vmul.f32 %v1849, %v1841
    %v1851 = vmul.f32 %v1850, %v1849
    %v1852 = vmul.f32 0.5, %v1851
    %v1853 = vsub.f32 1.5, %v1852
    %v1854 = vmul.f32 %v1849, %v1853
    %vm1855 = vweird.f32 %v1841
    %vm1856 = vweird.f32 %v1849
    %vm1857 = vmor %vm1855, %vm1856
    %v1858 = vsel %vm1857, %v1849, %v1854
    %v1859 = vrsqrt.pop %v1842
    %v1860 = vmul.f32 %v1859, %v1842
    %v1861 = vmul.f32 %v1860, %v1859
    %v1862 = vmul.f32 0.5, %v1861
    %v1863 = vsub.f32 1.5, %v1862
    %v1864 = vmul.f32 %v1859, %v1863
    %vm1865 = vweird.f32 %v1842
    %vm1866 = vweird.f32 %v1859
    %vm1867 = vmor %vm1865, %vm1866
    %v1868 = vsel %vm1867, %v1859, %v1864
    %v1869 = vrsqrt.pop %v1843
    %v1870 = vmul.f32 %v1869, %v1843
    %v1871 = vmul.f32 %v1870, %v1869
    %v1872 = vmul.f32 0.5, %v1871
    %v1873 = vsub.f32 1.5, %v1872
    %v1874 = vmul.f32 %v1869, %v1873
    %vm1875 = vweird.f32 %v1843
    %vm1876 = vweird.f32 %v1869
    %vm1877 = vmor %vm1875, %vm1876
    %v1878 = vsel %vm1877, %v1869, %v1874
    %v1879 = vrsqrt.pop %v1844
    %v1880 = vmul.f32 %v1879, %v1844
    %v1881 = vmul.f32 %v1880, %v1879
    %v1882 = vmul.f32 0.5, %v1881
    %v1883 = vsub.f32 1.5, %v1882
    %v1884 = vmul.f32 %v1879, %v1883
    %vm1885 = vweird.f32 %v1844
    %vm1886 = vweird.f32 %v1879
    %vm1887 = vmor %vm1885, %vm1886
    %v1888 = vsel %vm1887, %v1879, %v1884
    %v1889 = vrsqrt.pop %v1845
    %v1890 = vmul.f32 %v1889, %v1845
    %v1891 = vmul.f32 %v1890, %v1889
    %v1892 = vmul.f32 0.5, %v1891
    %v1893 = vsub.f32 1.5, %v1892
    %v1894 = vmul.f32 %v1889, %v1893
    %vm1895 = vweird.f32 %v1845
    %vm1896 = vweird.f32 %v1889
    %vm1897 = vmor %vm1895, %vm1896
    %v1898 = vsel %vm1897, %v1889, %v1894
    %v1899 = vrsqrt.pop %v1846
    %v1900 = vmul.f32 %v1899, %v1846
    %v1901 = vmul.f32 %v1900, %v1899
    %v1902 = vmul.f32 0.5, %v1901
    %v1903 = vsub.f32 1.5, %v1902
    %v1904 = vmul.f32 %v1899, %v1903
    %vm1905 = vweird.f32 %v1846
    %vm1906 = vweird.f32 %v1899
    %vm1907 = vmor %vm1905, %vm1906
    %v1908 = vsel %vm1907, %v1899, %v1904
    %v1909 = vrsqrt.pop %v1847
    %v1910 = vmul.f32 %v1909, %v1847
    %v1911 = vmul.f32 %v1910, %v1909
    %v1912 = vmul.f32 0.5, %v1911
    %v1913 = vsub.f32 1.5, %v1912
    %v1914 = vmul.f32 %v1909, %v1913
    %vm1915 = vweird.f32 %v1847
    %vm1916 = vweird.f32 %v1909
    %vm1917 = vmor %vm1915, %vm1916
    %v1918 = vsel %vm1917, %v1909, %v1914
    %v1919 = vrsqrt.pop %v1848
    %v1920 = vmul.f32 %v1919, %v1848
    %v1921 = vmul.f32 %v1920, %v1919
    %v1922 = vmul.f32 0.5, %v1921
    %v1923 = vsub.f32 1.5, %v1922
    %v1924 = vmul.f32 %v1919, %v1923
    %vm1925 = vweird.f32 %v1848
    %vm1926 = vweird.f32 %v1919
    %vm1927 = vmor %vm1925, %vm1926
    %v1928 = vsel %vm1927, %v1919, %v1924
    %v1929 = vmul.f32 %v1833, %v1858
    %v1930 = vmul.f32 %v1834, %v1868
    %v1931 = vmul.f32 %v1835, %v1878
    %v1932 = vmul.f32 %v1836, %v1888
    %v1933 = vmul.f32 %v1837, %v1898
    %v1934 = vmul.f32 %v1838, %v1908
    %v1935 = vmul.f32 %v1839, %v1918
    %v1936 = vmul.f32 %v1840, %v1928
    %v1938 = vperm.slane %v1625, 0
    %v1939 = vperm.slane %v1625, 1
    %v1940 = vperm.slane %v1625, 2
    %v1941 = vperm.slane %v1625, 3
    %v1946 = vmul.f32 %v1929, %v1938
    %v1947 = vmul.f32 %v1930, %v1939
    %v1948 = vmul.f32 %v1931, %v1940
    %v1949 = vmul.f32 %v1932, %v1941
    %v1950 = vmul.f32 %v1933, %v1938
    %v1951 = vmul.f32 %v1934, %v1939
    %v1952 = vmul.f32 %v1935, %v1940
    %v1953 = vmul.f32 %v1936, %v1941
    %v1955 = vperm.slane %v1627, 0
    %v1956 = vperm.slane %v1627, 1
    %v1957 = vperm.slane %v1627, 2
    %v1958 = vperm.slane %v1627, 3
    %v1963 = vadd.f32 %v1946, %v1955
    %v1964 = vadd.f32 %v1947, %v1956
    %v1965 = vadd.f32 %v1948, %v1957
    %v1966 = vadd.f32 %v1949, %v1958
    %v1967 = vadd.f32 %v1950, %v1955
    %v1968 = vadd.f32 %v1951, %v1956
    %v1969 = vadd.f32 %v1952, %v1957
    %v1970 = vadd.f32 %v1953, %v1958
    %v1971 = vmax.f32 %v1963, 0.0
    %v1972 = vmax.f32 %v1964, 0.0
    %v1973 = vmax.f32 %v1965, 0.0
    %v1974 = vmax.f32 %v1966, 0.0
    %v1975 = vmax.f32 %v1967, 0.0
    %v1976 = vmax.f32 %v1968, 0.0
    %v1977 = vmax.f32 %v1969, 0.0
    %v1978 = vmax.f32 %v1970, 0.0
    %v1979 = vpack.c.bf16 %v1975, %v1971
    %v1980 = vpack.c.bf16 %v1976, %v1972
    %v1981 = vpack.c.bf16 %v1977, %v1973
    %v1982 = vpack.c.bf16 %v1978, %v1974
    %v1983 = vld [vmem:[#allocation5] sm:$0xff]
    %v1984 = vld [vmem:[#allocation5 + $0x8] sm:$0xff]
    %v1985 = vld [vmem:[#allocation5 + $0x10] sm:$0xff]
    %v1986 = vld [vmem:[#allocation5 + $0x18] sm:$0xff]
    %v1987 = vld [vmem:[#allocation5 + $0x20] sm:$0xff]
    %v1988 = vld [vmem:[#allocation5 + $0x28] sm:$0xff]
    %v1989 = vld [vmem:[#allocation5 + $0x30] sm:$0xff]
    %v1990 = vld [vmem:[#allocation5 + $0x38] sm:$0xff]
    %v1991 = vld [vmem:[#allocation5 + $0x40] sm:$0xff]
    %v1992 = vld [vmem:[#allocation5 + $0x48] sm:$0xff]
    %v1993 = vld [vmem:[#allocation5 + $0x50] sm:$0xff]
    %v1994 = vld [vmem:[#allocation5 + $0x58] sm:$0xff]
    %v1995 = vld [vmem:[#allocation5 + $0x60] sm:$0xff]
    %v1996 = vld [vmem:[#allocation5 + $0x68] sm:$0xff]
    %v1997 = vld [vmem:[#allocation5 + $0x70] sm:$0xff]
    %v1998 = vld [vmem:[#allocation5 + $0x78] sm:$0xff]
    %v1999 = vld [vmem:[#allocation5 + $0x80] sm:$0xff]
    %v2000 = vld [vmem:[#allocation5 + $0x88] sm:$0xff]
    %v2001 = vld [vmem:[#allocation5 + $0x90] sm:$0xff]
    %v2002 = vld [vmem:[#allocation5 + $0x98] sm:$0xff]
    %v2003 = vld [vmem:[#allocation5 + $0xa0] sm:$0xff]
    %v2004 = vld [vmem:[#allocation5 + $0xa8] sm:$0xff]
    %v2005 = vld [vmem:[#allocation5 + $0xb0] sm:$0xff]
    %v2006 = vld [vmem:[#allocation5 + $0xb8] sm:$0xff]
    %v2007 = vld [vmem:[#allocation5 + $0xc0] sm:$0xff]
    %v2008 = vld [vmem:[#allocation5 + $0xc8] sm:$0xff]
    %v2009 = vld [vmem:[#allocation5 + $0xd0] sm:$0xff]
    %v2010 = vld [vmem:[#allocation5 + $0xd8] sm:$0xff]
    %v2011 = vld [vmem:[#allocation5 + $0xe0] sm:$0xff]
    %v2012 = vld [vmem:[#allocation5 + $0xe8] sm:$0xff]
    %v2013 = vld [vmem:[#allocation5 + $0xf0] sm:$0xff]
    %v2014 = vld [vmem:[#allocation5 + $0xf8] sm:$0xff]
    %v2015 = vld [vmem:[#allocation5 + $0x100] sm:$0xff]
    %v2016 = vld [vmem:[#allocation5 + $0x108] sm:$0xff]
    %v2017 = vld [vmem:[#allocation5 + $0x110] sm:$0xff]
    %v2018 = vld [vmem:[#allocation5 + $0x118] sm:$0xff]
    %v2019 = vld [vmem:[#allocation5 + $0x120] sm:$0xff]
    %v2020 = vld [vmem:[#allocation5 + $0x128] sm:$0xff]
    %v2021 = vld [vmem:[#allocation5 + $0x130] sm:$0xff]
    %v2022 = vld [vmem:[#allocation5 + $0x138] sm:$0xff]
    %v2023 = vld [vmem:[#allocation5 + $0x140] sm:$0xff]
    %v2024 = vld [vmem:[#allocation5 + $0x148] sm:$0xff]
    %v2025 = vld [vmem:[#allocation5 + $0x150] sm:$0xff]
    %v2026 = vld [vmem:[#allocation5 + $0x158] sm:$0xff]
    %v2027 = vld [vmem:[#allocation5 + $0x160] sm:$0xff]
    %v2028 = vld [vmem:[#allocation5 + $0x168] sm:$0xff]
    %v2029 = vld [vmem:[#allocation5 + $0x170] sm:$0xff]
    %v2030 = vld [vmem:[#allocation5 + $0x178] sm:$0xff]
    %v2031 = vld [vmem:[#allocation5 + $0x180] sm:$0xff]
    %v2032 = vld [vmem:[#allocation5 + $0x188] sm:$0xff]
    %v2033 = vld [vmem:[#allocation5 + $0x190] sm:$0xff]
    %v2034 = vld [vmem:[#allocation5 + $0x198] sm:$0xff]
    %v2035 = vld [vmem:[#allocation5 + $0x1a0] sm:$0xff]
    %v2036 = vld [vmem:[#allocation5 + $0x1a8] sm:$0xff]
    %v2037 = vld [vmem:[#allocation5 + $0x1b0] sm:$0xff]
    %v2038 = vld [vmem:[#allocation5 + $0x1b8] sm:$0xff]
    %v2039 = vld [vmem:[#allocation5 + $0x1c0] sm:$0xff]
    %v2040 = vld [vmem:[#allocation5 + $0x1c8] sm:$0xff]
    %v2041 = vld [vmem:[#allocation5 + $0x1d0] sm:$0xff]
    %v2042 = vld [vmem:[#allocation5 + $0x1d8] sm:$0xff]
    %v2043 = vld [vmem:[#allocation5 + $0x1e0] sm:$0xff]
    %v2044 = vld [vmem:[#allocation5 + $0x1e8] sm:$0xff]
    %v2045 = vld [vmem:[#allocation5 + $0x1f0] sm:$0xff]
    %v2046 = vld [vmem:[#allocation5 + $0x1f8] sm:$0xff]
    %s2047 = scalar_lea.vmem [#allocation8], 4
    %v2048 = vld [vmem:[%s2047] ss:$8 sm:$0x3]
    %v2050 = vperm.slane %v2048, 0
    %v2051 = vperm.slane %v2048, 1
    %v2118 = vunpack.c.l.b16 %v1983
    %v2119 = vunpack.c.h.b16 %v1983
    %v2120 = vunpack.c.l.b16 %v1984
    %v2121 = vunpack.c.h.b16 %v1984
    %v2122 = vunpack.c.l.b16 %v1985
    %v2123 = vunpack.c.h.b16 %v1985
    %v2124 = vunpack.c.l.b16 %v1986
    %v2125 = vunpack.c.h.b16 %v1986
    %v2126 = vunpack.c.l.b16 %v1987
    %v2127 = vunpack.c.h.b16 %v1987
    %v2128 = vunpack.c.l.b16 %v1988
    %v2129 = vunpack.c.h.b16 %v1988
    %v2130 = vunpack.c.l.b16 %v1989
    %v2131 = vunpack.c.h.b16 %v1989
    %v2132 = vunpack.c.l.b16 %v1990
    %v2133 = vunpack.c.h.b16 %v1990
    %v2134 = vunpack.c.l.b16 %v1991
    %v2135 = vunpack.c.h.b16 %v1991
    %v2136 = vunpack.c.l.b16 %v1992
    %v2137 = vunpack.c.h.b16 %v1992
    %v2138 = vunpack.c.l.b16 %v1993
    %v2139 = vunpack.c.h.b16 %v1993
    %v2140 = vunpack.c.l.b16 %v1994
    %v2141 = vunpack.c.h.b16 %v1994
    %v2142 = vunpack.c.l.b16 %v1995
    %v2143 = vunpack.c.h.b16 %v1995
    %v2144 = vunpack.c.l.b16 %v1996
    %v2145 = vunpack.c.h.b16 %v1996
    %v2146 = vunpack.c.l.b16 %v1997
    %v2147 = vunpack.c.h.b16 %v1997
    %v2148 = vunpack.c.l.b16 %v1998
    %v2149 = vunpack.c.h.b16 %v1998
    %v2150 = vunpack.c.l.b16 %v1999
    %v2151 = vunpack.c.h.b16 %v1999
    %v2152 = vunpack.c.l.b16 %v2000
    %v2153 = vunpack.c.h.b16 %v2000
    %v2154 = vunpack.c.l.b16 %v2001
    %v2155 = vunpack.c.h.b16 %v2001
    %v2156 = vunpack.c.l.b16 %v2002
    %v2157 = vunpack.c.h.b16 %v2002
    %v2158 = vunpack.c.l.b16 %v2003
    %v2159 = vunpack.c.h.b16 %v2003
    %v2160 = vunpack.c.l.b16 %v2004
    %v2161 = vunpack.c.h.b16 %v2004
    %v2162 = vunpack.c.l.b16 %v2005
    %v2163 = vunpack.c.h.b16 %v2005
    %v2164 = vunpack.c.l.b16 %v2006
    %v2165 = vunpack.c.h.b16 %v2006
    %v2166 = vunpack.c.l.b16 %v2007
    %v2167 = vunpack.c.h.b16 %v2007
    %v2168 = vunpack.c.l.b16 %v2008
    %v2169 = vunpack.c.h.b16 %v2008
    %v2170 = vunpack.c.l.b16 %v2009
    %v2171 = vunpack.c.h.b16 %v2009
    %v2172 = vunpack.c.l.b16 %v2010
    %v2173 = vunpack.c.h.b16 %v2010
    %v2174 = vunpack.c.l.b16 %v2011
    %v2175 = vunpack.c.h.b16 %v2011
    %v2176 = vunpack.c.l.b16 %v2012
    %v2177 = vunpack.c.h.b16 %v2012
    %v2178 = vunpack.c.l.b16 %v2013
    %v2179 = vunpack.c.h.b16 %v2013
    %v2180 = vunpack.c.l.b16 %v2014
    %v2181 = vunpack.c.h.b16 %v2014
    %v2182 = vunpack.c.l.b16 %v2015
    %v2183 = vunpack.c.h.b16 %v2015
    %v2184 = vunpack.c.l.b16 %v2016
    %v2185 = vunpack.c.h.b16 %v2016
    %v2186 = vunpack.c.l.b16 %v2017
    %v2187 = vunpack.c.h.b16 %v2017
    %v2188 = vunpack.c.l.b16 %v2018
    %v2189 = vunpack.c.h.b16 %v2018
    %v2190 = vunpack.c.l.b16 %v2019
    %v2191 = vunpack.c.h.b16 %v2019
    %v2192 = vunpack.c.l.b16 %v2020
    %v2193 = vunpack.c.h.b16 %v2020
    %v2194 = vunpack.c.l.b16 %v2021
    %v2195 = vunpack.c.h.b16 %v2021
    %v2196 = vunpack.c.l.b16 %v2022
    %v2197 = vunpack.c.h.b16 %v2022
    %v2198 = vunpack.c.l.b16 %v2023
    %v2199 = vunpack.c.h.b16 %v2023
    %v2200 = vunpack.c.l.b16 %v2024
    %v2201 = vunpack.c.h.b16 %v2024
    %v2202 = vunpack.c.l.b16 %v2025
    %v2203 = vunpack.c.h.b16 %v2025
    %v2204 = vunpack.c.l.b16 %v2026
    %v2205 = vunpack.c.h.b16 %v2026
    %v2206 = vunpack.c.l.b16 %v2027
    %v2207 = vunpack.c.h.b16 %v2027
    %v2208 = vunpack.c.l.b16 %v2028
    %v2209 = vunpack.c.h.b16 %v2028
    %v2210 = vunpack.c.l.b16 %v2029
    %v2211 = vunpack.c.h.b16 %v2029
    %v2212 = vunpack.c.l.b16 %v2030
    %v2213 = vunpack.c.h.b16 %v2030
    %v2214 = vunpack.c.l.b16 %v2031
    %v2215 = vunpack.c.h.b16 %v2031
    %v2216 = vunpack.c.l.b16 %v2032
    %v2217 = vunpack.c.h.b16 %v2032
    %v2218 = vunpack.c.l.b16 %v2033
    %v2219 = vunpack.c.h.b16 %v2033
    %v2220 = vunpack.c.l.b16 %v2034
    %v2221 = vunpack.c.h.b16 %v2034
    %v2222 = vunpack.c.l.b16 %v2035
    %v2223 = vunpack.c.h.b16 %v2035
    %v2224 = vunpack.c.l.b16 %v2036
    %v2225 = vunpack.c.h.b16 %v2036
    %v2226 = vunpack.c.l.b16 %v2037
    %v2227 = vunpack.c.h.b16 %v2037
    %v2228 = vunpack.c.l.b16 %v2038
    %v2229 = vunpack.c.h.b16 %v2038
    %v2230 = vunpack.c.l.b16 %v2039
    %v2231 = vunpack.c.h.b16 %v2039
    %v2232 = vunpack.c.l.b16 %v2040
    %v2233 = vunpack.c.h.b16 %v2040
    %v2234 = vunpack.c.l.b16 %v2041
    %v2235 = vunpack.c.h.b16 %v2041
    %v2236 = vunpack.c.l.b16 %v2042
    %v2237 = vunpack.c.h.b16 %v2042
    %v2238 = vunpack.c.l.b16 %v2043
    %v2239 = vunpack.c.h.b16 %v2043
    %v2240 = vunpack.c.l.b16 %v2044
    %v2241 = vunpack.c.h.b16 %v2044
    %v2242 = vunpack.c.l.b16 %v2045
    %v2243 = vunpack.c.h.b16 %v2045
    %v2244 = vunpack.c.l.b16 %v2046
    %v2245 = vunpack.c.h.b16 %v2046
    %v2246 = vpack.c.b16 %v2120, %v2118
    %v2247 = vpack.c.b16 %v2121, %v2119
    %v2248 = vpack.c.b16 %v2124, %v2122
    %v2249 = vpack.c.b16 %v2125, %v2123
    %v2250 = vpack.c.b16 %v2128, %v2126
    %v2251 = vpack.c.b16 %v2129, %v2127
    %v2252 = vpack.c.b16 %v2132, %v2130
    %v2253 = vpack.c.b16 %v2133, %v2131
    %v2254 = vpack.c.b16 %v2136, %v2134
    %v2255 = vpack.c.b16 %v2137, %v2135
    %v2256 = vpack.c.b16 %v2140, %v2138
    %v2257 = vpack.c.b16 %v2141, %v2139
    %v2258 = vpack.c.b16 %v2144, %v2142
    %v2259 = vpack.c.b16 %v2145, %v2143
    %v2260 = vpack.c.b16 %v2148, %v2146
    %v2261 = vpack.c.b16 %v2149, %v2147
    %v2262 = vpack.c.b16 %v2152, %v2150
    %v2263 = vpack.c.b16 %v2153, %v2151
    %v2264 = vpack.c.b16 %v2156, %v2154
    %v2265 = vpack.c.b16 %v2157, %v2155
    %v2266 = vpack.c.b16 %v2160, %v2158
    %v2267 = vpack.c.b16 %v2161, %v2159
    %v2268 = vpack.c.b16 %v2164, %v2162
    %v2269 = vpack.c.b16 %v2165, %v2163
    %v2270 = vpack.c.b16 %v2168, %v2166
    %v2271 = vpack.c.b16 %v2169, %v2167
    %v2272 = vpack.c.b16 %v2172, %v2170
    %v2273 = vpack.c.b16 %v2173, %v2171
    %v2274 = vpack.c.b16 %v2176, %v2174
    %v2275 = vpack.c.b16 %v2177, %v2175
    %v2276 = vpack.c.b16 %v2180, %v2178
    %v2277 = vpack.c.b16 %v2181, %v2179
    %v2278 = vpack.c.b16 %v2184, %v2182
    %v2279 = vpack.c.b16 %v2185, %v2183
    %v2280 = vpack.c.b16 %v2188, %v2186
    %v2281 = vpack.c.b16 %v2189, %v2187
    %v2282 = vpack.c.b16 %v2192, %v2190
    %v2283 = vpack.c.b16 %v2193, %v2191
    %v2284 = vpack.c.b16 %v2196, %v2194
    %v2285 = vpack.c.b16 %v2197, %v2195
    %v2286 = vpack.c.b16 %v2200, %v2198
    %v2287 = vpack.c.b16 %v2201, %v2199
    %v2288 = vpack.c.b16 %v2204, %v2202
    %v2289 = vpack.c.b16 %v2205, %v2203
    %v2290 = vpack.c.b16 %v2208, %v2206
    %v2291 = vpack.c.b16 %v2209, %v2207
    %v2292 = vpack.c.b16 %v2212, %v2210
    %v2293 = vpack.c.b16 %v2213, %v2211
    %v2294 = vpack.c.b16 %v2216, %v2214
    %v2295 = vpack.c.b16 %v2217, %v2215
    %v2296 = vpack.c.b16 %v2220, %v2218
    %v2297 = vpack.c.b16 %v2221, %v2219
    %v2298 = vpack.c.b16 %v2224, %v2222
    %v2299 = vpack.c.b16 %v2225, %v2223
    %v2300 = vpack.c.b16 %v2228, %v2226
    %v2301 = vpack.c.b16 %v2229, %v2227
    %v2302 = vpack.c.b16 %v2232, %v2230
    %v2303 = vpack.c.b16 %v2233, %v2231
    %v2304 = vpack.c.b16 %v2236, %v2234
    %v2305 = vpack.c.b16 %v2237, %v2235
    %v2306 = vpack.c.b16 %v2240, %v2238
    %v2307 = vpack.c.b16 %v2241, %v2239
    %v2308 = vpack.c.b16 %v2244, %v2242
    %v2309 = vpack.c.b16 %v2245, %v2243
    %2374 = vmatpush.bf16.msra.mxu0 %v2260
    %2375 = vmatpush.bf16.msra.mxu0 %v2258
    %2376 = vmatpush.bf16.msra.mxu0 %v2256
    %2377 = vmatpush.bf16.msra.mxu0 %v2254
    %2378 = vmatpush.bf16.msra.mxu0 %v2252
    %2379 = vmatpush.bf16.msra.mxu0 %v2250
    %2380 = vmatpush.bf16.msra.mxu0 %v2248
    %2381 = vmatpush.bf16.msra.mxu0 %v2246
    %2382 = vmatmul.bf16.gmra.mxu0 %v1979
    %v2383 = vpop.f32.mrf.mxu0
    %v2384 = vadd.f32 %v2050, %v2383
    %v2385 = vpop.f32.mrf.mxu0
    %v2386 = vadd.f32 %v2050, %v2385
    %2387 = vdwg.mxu0
    %2388 = vmatpush.bf16.msra.mxu0 %v2276
    %2389 = vmatpush.bf16.msra.mxu0 %v2274
    %2390 = vmatpush.bf16.msra.mxu0 %v2272
    %2391 = vmatpush.bf16.msra.mxu0 %v2270
    %2392 = vmatpush.bf16.msra.mxu0 %v2268
    %2393 = vmatpush.bf16.msra.mxu0 %v2266
    %2394 = vmatpush.bf16.msra.mxu0 %v2264
    %2395 = vmatpush.bf16.msra.mxu0 %v2262
    %2396 = vmatmul.bf16.gmra.mxu0 %v1980
    %v2397 = vpop.f32.mrf.mxu0
    %v2398 = vadd.f32 %v2384, %v2397
    %v2399 = vpop.f32.mrf.mxu0
    %v2400 = vadd.f32 %v2386, %v2399
    %2401 = vdwg.mxu0
    %2402 = vmatpush.bf16.msra.mxu0 %v2292
    %2403 = vmatpush.bf16.msra.mxu0 %v2290
    %2404 = vmatpush.bf16.msra.mxu0 %v2288
    %2405 = vmatpush.bf16.msra.mxu0 %v2286
    %2406 = vmatpush.bf16.msra.mxu0 %v2284
    %2407 = vmatpush.bf16.msra.mxu0 %v2282
    %2408 = vmatpush.bf16.msra.mxu0 %v2280
    %2409 = vmatpush.bf16.msra.mxu0 %v2278
    %2410 = vmatmul.bf16.gmra.mxu0 %v1981
    %v2411 = vpop.f32.mrf.mxu0
    %v2412 = vadd.f32 %v2398, %v2411
    %v2413 = vpop.f32.mrf.mxu0
    %v2414 = vadd.f32 %v2400, %v2413
    %2415 = vdwg.mxu0
    %2416 = vmatpush.bf16.msra.mxu0 %v2308
    %2417 = vmatpush.bf16.msra.mxu0 %v2306
    %2418 = vmatpush.bf16.msra.mxu0 %v2304
    %2419 = vmatpush.bf16.msra.mxu0 %v2302
    %2420 = vmatpush.bf16.msra.mxu0 %v2300
    %2421 = vmatpush.bf16.msra.mxu0 %v2298
    %2422 = vmatpush.bf16.msra.mxu0 %v2296
    %2423 = vmatpush.bf16.msra.mxu0 %v2294
    %2424 = vmatmul.bf16.gmra.mxu0 %v1982
    %v2425 = vpop.f32.mrf.mxu0
    %v2426 = vadd.f32 %v2412, %v2425
    %v2427 = vpop.f32.mrf.mxu0
    %v2428 = vadd.f32 %v2414, %v2427
    %2429 = vdwg.mxu0
    %2430 = vmatpush.bf16.msra.mxu0 %v2261
    %2431 = vmatpush.bf16.msra.mxu0 %v2259
    %2432 = vmatpush.bf16.msra.mxu0 %v2257
    %2433 = vmatpush.bf16.msra.mxu0 %v2255
    %2434 = vmatpush.bf16.msra.mxu0 %v2253
    %2435 = vmatpush.bf16.msra.mxu0 %v2251
    %2436 = vmatpush.bf16.msra.mxu0 %v2249
    %2437 = vmatpush.bf16.msra.mxu0 %v2247
    %2438 = vmatmul.bf16.gmra.mxu0 %v1979
    %v2439 = vpop.f32.mrf.mxu0
    %v2440 = vadd.f32 %v2051, %v2439
    %v2441 = vpop.f32.mrf.mxu0
    %v2442 = vadd.f32 %v2051, %v2441
    %2443 = vdwg.mxu0
    %2444 = vmatpush.bf16.msra.mxu0 %v2277
    %2445 = vmatpush.bf16.msra.mxu0 %v2275
    %2446 = vmatpush.bf16.msra.mxu0 %v2273
    %2447 = vmatpush.bf16.msra.mxu0 %v2271
    %2448 = vmatpush.bf16.msra.mxu0 %v2269
    %2449 = vmatpush.bf16.msra.mxu0 %v2267
    %2450 = vmatpush.bf16.msra.mxu0 %v2265
    %2451 = vmatpush.bf16.msra.mxu0 %v2263
    %2452 = vmatmul.bf16.gmra.mxu0 %v1980
    %v2453 = vpop.f32.mrf.mxu0
    %v2454 = vadd.f32 %v2440, %v2453
    %v2455 = vpop.f32.mrf.mxu0
    %v2456 = vadd.f32 %v2442, %v2455
    %2457 = vdwg.mxu0
    %2458 = vmatpush.bf16.msra.mxu0 %v2293
    %2459 = vmatpush.bf16.msra.mxu0 %v2291
    %2460 = vmatpush.bf16.msra.mxu0 %v2289
    %2461 = vmatpush.bf16.msra.mxu0 %v2287
    %2462 = vmatpush.bf16.msra.mxu0 %v2285
    %2463 = vmatpush.bf16.msra.mxu0 %v2283
    %2464 = vmatpush.bf16.msra.mxu0 %v2281
    %2465 = vmatpush.bf16.msra.mxu0 %v2279
    %2466 = vmatmul.bf16.gmra.mxu0 %v1981
    %v2467 = vpop.f32.mrf.mxu0
    %v2468 = vadd.f32 %v2454, %v2467
    %v2469 = vpop.f32.mrf.mxu0
    %v2470 = vadd.f32 %v2456, %v2469
    %2471 = vdwg.mxu0
    %2472 = vmatpush.bf16.msra.mxu0 %v2309
    %2473 = vmatpush.bf16.msra.mxu0 %v2307
    %2474 = vmatpush.bf16.msra.mxu0 %v2305
    %2475 = vmatpush.bf16.msra.mxu0 %v2303
    %2476 = vmatpush.bf16.msra.mxu0 %v2301
    %2477 = vmatpush.bf16.msra.mxu0 %v2299
    %2478 = vmatpush.bf16.msra.mxu0 %v2297
    %2479 = vmatpush.bf16.msra.mxu0 %v2295
    %2480 = vmatmul.bf16.gmra.mxu0 %v1982
    %v2481 = vpop.f32.mrf.mxu0
    %v2482 = vadd.f32 %v2468, %v2481
    %v2483 = vpop.f32.mrf.mxu0
    %v2484 = vadd.f32 %v2470, %v2483
    %2485 = vdwg.mxu0
    %v2486 = vpack.c.bf16 %v2428, %v2426
    %v2487 = vld [vmem:[%s5] sm:$0xff]
    %v2488 = vld [vmem:[%s5 + $0x8] sm:$0xff]
    %v2489 = vld [vmem:[%s5 + $0x10] sm:$0xff]
    %v2490 = vld [vmem:[%s5 + $0x18] sm:$0xff]
    %v2491 = vld [vmem:[%s5 + $0x20] sm:$0xff]
    %v2492 = vld [vmem:[%s5 + $0x28] sm:$0xff]
    %v2493 = vld [vmem:[%s5 + $0x30] sm:$0xff]
    %v2494 = vld [vmem:[%s5 + $0x38] sm:$0xff]
    %v2495 = vld [vmem:[%s5 + $0x40] sm:$0xff]
    %v2496 = vld [vmem:[%s5 + $0x48] sm:$0xff]
    %v2497 = vld [vmem:[%s5 + $0x50] sm:$0xff]
    %v2498 = vld [vmem:[%s5 + $0x58] sm:$0xff]
    %v2499 = vld [vmem:[%s5 + $0x60] sm:$0xff]
    %v2500 = vld [vmem:[%s5 + $0x68] sm:$0xff]
    %v2501 = vld [vmem:[%s5 + $0x70] sm:$0xff]
    %v2502 = vld [vmem:[%s5 + $0x78] sm:$0xff]
    %s2503 = scalar_lea.vmem [#allocation8], 5
    %v2504 = vld [vmem:[%s2503] ss:$8 sm:$0x3]
    %v2506 = vperm.slane %v2504, 0
    %v2507 = vperm.slane %v2504, 1
    %v2526 = vunpack.c.l.b16 %v2487
    %v2527 = vunpack.c.h.b16 %v2487
    %v2528 = vunpack.c.l.b16 %v2488
    %v2529 = vunpack.c.h.b16 %v2488
    %v2530 = vunpack.c.l.b16 %v2489
    %v2531 = vunpack.c.h.b16 %v2489
    %v2532 = vunpack.c.l.b16 %v2490
    %v2533 = vunpack.c.h.b16 %v2490
    %v2534 = vunpack.c.l.b16 %v2491
    %v2535 = vunpack.c.h.b16 %v2491
    %v2536 = vunpack.c.l.b16 %v2492
    %v2537 = vunpack.c.h.b16 %v2492
    %v2538 = vunpack.c.l.b16 %v2493
    %v2539 = vunpack.c.h.b16 %v2493
    %v2540 = vunpack.c.l.b16 %v2494
    %v2541 = vunpack.c.h.b16 %v2494
    %v2542 = vunpack.c.l.b16 %v2495
    %v2543 = vunpack.c.h.b16 %v2495
    %v2544 = vunpack.c.l.b16 %v2496
    %v2545 = vunpack.c.h.b16 %v2496
    %v2546 = vunpack.c.l.b16 %v2497
    %v2547 = vunpack.c.h.b16 %v2497
    %v2548 = vunpack.c.l.b16 %v2498
    %v2549 = vunpack.c.h.b16 %v2498
    %v2550 = vunpack.c.l.b16 %v2499
    %v2551 = vunpack.c.h.b16 %v2499
    %v2552 = vunpack.c.l.b16 %v2500
    %v2553 = vunpack.c.h.b16 %v2500
    %v2554 = vunpack.c.l.b16 %v2501
    %v2555 = vunpack.c.h.b16 %v2501
    %v2556 = vunpack.c.l.b16 %v2502
    %v2557 = vunpack.c.h.b16 %v2502
    %v2558 = vpack.c.b16 %v2528, %v2526
    %v2559 = vpack.c.b16 %v2529, %v2527
    %v2560 = vpack.c.b16 %v2532, %v2530
    %v2561 = vpack.c.b16 %v2533, %v2531
    %v2562 = vpack.c.b16 %v2536, %v2534
    %v2563 = vpack.c.b16 %v2537, %v2535
    %v2564 = vpack.c.b16 %v2540, %v2538
    %v2565 = vpack.c.b16 %v2541, %v2539
    %v2566 = vpack.c.b16 %v2544, %v2542
    %v2567 = vpack.c.b16 %v2545, %v2543
    %v2568 = vpack.c.b16 %v2548, %v2546
    %v2569 = vpack.c.b16 %v2549, %v2547
    %v2570 = vpack.c.b16 %v2552, %v2550
    %v2571 = vpack.c.b16 %v2553, %v2551
    %v2572 = vpack.c.b16 %v2556, %v2554
    %v2573 = vpack.c.b16 %v2557, %v2555
    %2590 = vmatpush.bf16.msra.mxu0 %v2572
    %2591 = vmatpush.bf16.msra.mxu0 %v2570
    %2592 = vmatpush.bf16.msra.mxu0 %v2568
    %2593 = vmatpush.bf16.msra.mxu0 %v2566
    %2594 = vmatpush.bf16.msra.mxu0 %v2564
    %2595 = vmatpush.bf16.msra.mxu0 %v2562
    %2596 = vmatpush.bf16.msra.mxu0 %v2560
    %2597 = vmatpush.bf16.msra.mxu0 %v2558
    %2598 = vmatmul.bf16.gmra.mxu0 %v2486
    %v2599 = vpop.f32.mrf.mxu0
    %v2600 = vadd.f32 %v2506, %v2599
    %v2601 = vpop.f32.mrf.mxu0
    %v2602 = vadd.f32 %v2506, %v2601
    %2603 = vdwg.mxu0
    %2604 = vmatpush.bf16.msra.mxu0 %v2573
    %2605 = vmatpush.bf16.msra.mxu0 %v2571
    %2606 = vmatpush.bf16.msra.mxu0 %v2569
    %2607 = vmatpush.bf16.msra.mxu0 %v2567
    %2608 = vmatpush.bf16.msra.mxu0 %v2565
    %2609 = vmatpush.bf16.msra.mxu0 %v2563
    %2610 = vmatpush.bf16.msra.mxu0 %v2561
    %2611 = vmatpush.bf16.msra.mxu0 %v2559
    %2612 = vmatmul.bf16.gmra.mxu0 %v2486
    %v2613 = vpop.f32.mrf.mxu0
    %v2614 = vadd.f32 %v2507, %v2613
    %v2615 = vpop.f32.mrf.mxu0
    %v2616 = vadd.f32 %v2507, %v2615
    %2617 = vdwg.mxu0
    %s2618 = scalar_lea.vmem [#allocation8], 6
    %v2619 = vld [vmem:[%s2618] ss:$8 sm:$0x3]
    %s2620 = scalar_lea.vmem [#allocation8], 7
    %v2621 = vld [vmem:[%s2620] ss:$8 sm:$0x3]
    %v2622 = vsel %vm1631, %v2600, 0.0
    %v2623 = vsel %vm1631, %v2614, 0.0
    %v2624 = vsel %vm1632, %v2602, 0.0
    %v2625 = vsel %vm1632, %v2616, 0.0
    %v2626 = vsub.f32 %v2600, %v2622
    %v2627 = vsub.f32 %v2614, %v2623
    %v2628 = vsub.f32 %v2602, %v2624
    %v2629 = vsub.f32 %v2616, %v2625
    %v2630 = vadd.f32 %v2622, %v2624
    %v2631 = vrot.slane %v2630, 4
    %v2632 = vadd.f32 %v2630, %v2631
    %v2633 = vrot.slane %v2632, 2
    %v2634 = vadd.f32 %v2632, %v2633
    %v2635 = vrot.slane %v2634, 1
    %v2636 = vadd.f32 %v2634, %v2635
    %v2637 = vadd.f32 %v2623, %v2625
    %v2638 = vrot.slane %v2637, 4
    %v2639 = vadd.f32 %v2637, %v2638
    %v2640 = vrot.slane %v2639, 2
    %v2641 = vadd.f32 %v2639, %v2640
    %v2642 = vrot.slane %v2641, 1
    %v2643 = vadd.f32 %v2641, %v2642
    %v2644 = vmul.f32 %v2636, 0.125
    %v2645 = vmul.f32 %v2643, 0.125
    %v2646 = vadd.f32 %v2626, %v2628
    %v2647 = vrot.slane %v2646, 4
    %v2648 = vadd.f32 %v2646, %v2647
    %v2649 = vrot.slane %v2648, 2
    %v2650 = vadd.f32 %v2648, %v2649
    %v2651 = vrot.slane %v2650, 1
    %v2652 = vadd.f32 %v2650, %v2651
    %v2653 = vadd.f32 %v2627, %v2629
    %v2654 = vrot.slane %v2653, 4
    %v2655 = vadd.f32 %v2653, %v2654
    %v2656 = vrot.slane %v2655, 2
    %v2657 = vadd.f32 %v2655, %v2656
    %v2658 = vrot.slane %v2657, 1
    %v2659 = vadd.f32 %v2657, %v2658
    %v2660 = vmul.f32 %v2652, 0.125
    %v2661 = vmul.f32 %v2659, 0.125
    %v2662 = vmul.f32 %v2622, %v2622
    %v2663 = vmul.f32 %v2623, %v2623
    %v2664 = vmul.f32 %v2624, %v2624
    %v2665 = vmul.f32 %v2625, %v2625
    %v2666 = vadd.f32 %v2662, %v2664
    %v2667 = vrot.slane %v2666, 4
    %v2668 = vadd.f32 %v2666, %v2667
    %v2669 = vrot.slane %v2668, 2
    %v2670 = vadd.f32 %v2668, %v2669
    %v2671 = vrot.slane %v2670, 1
    %v2672 = vadd.f32 %v2670, %v2671
    %v2673 = vadd.f32 %v2663, %v2665
    %v2674 = vrot.slane %v2673, 4
    %v2675 = vadd.f32 %v2673, %v2674
    %v2676 = vrot.slane %v2675, 2
    %v2677 = vadd.f32 %v2675, %v2676
    %v2678 = vrot.slane %v2677, 1
    %v2679 = vadd.f32 %v2677, %v2678
    %v2680 = vmul.f32 %v2672, 0.125
    %v2681 = vmul.f32 %v2679, 0.125
    %v2682 = vmul.f32 %v2626, %v2626
    %v2683 = vmul.f32 %v2627, %v2627
    %v2684 = vmul.f32 %v2628, %v2628
    %v2685 = vmul.f32 %v2629, %v2629
    %v2686 = vadd.f32 %v2682, %v2684
    %v2687 = vrot.slane %v2686, 4
    %v2688 = vadd.f32 %v2686, %v2687
    %v2689 = vrot.slane %v2688, 2
    %v2690 = vadd.f32 %v2688, %v2689
    %v2691 = vrot.slane %v2690, 1
    %v2692 = vadd.f32 %v2690, %v2691
    %v2693 = vadd.f32 %v2683, %v2685
    %v2694 = vrot.slane %v2693, 4
    %v2695 = vadd.f32 %v2693, %v2694
    %v2696 = vrot.slane %v2695, 2
    %v2697 = vadd.f32 %v2695, %v2696
    %v2698 = vrot.slane %v2697, 1
    %v2699 = vadd.f32 %v2697, %v2698
    %v2700 = vmul.f32 %v2692, 0.125
    %v2701 = vmul.f32 %v2699, 0.125
    %v2702 = vmul.f32 %v2644, %v2644
    %v2703 = vmul.f32 %v2645, %v2645
    %v2704 = vsub.f32 %v2680, %v2702
    %v2705 = vsub.f32 %v2681, %v2703
    %v2706 = vmax.f32 %v2704, 0.0
    %v2707 = vmax.f32 %v2705, 0.0
    %v2708 = vmul.f32 %v2660, %v2660
    %v2709 = vmul.f32 %v2661, %v2661
    %v2710 = vsub.f32 %v2700, %v2708
    %v2711 = vsub.f32 %v2701, %v2709
    %v2712 = vmax.f32 %v2710, 0.0
    %v2713 = vmax.f32 %v2711, 0.0
    %v2714 = vsel %vm1631, %v2644, %v2660
    %v2715 = vsel %vm1631, %v2645, %v2661
    %v2716 = vsel %vm1632, %v2644, %v2660
    %v2717 = vsel %vm1632, %v2645, %v2661
    %v2718 = vsel %vm1631, %v2706, %v2712
    %v2719 = vsel %vm1631, %v2707, %v2713
    %v2720 = vsel %vm1632, %v2706, %v2712
    %v2721 = vsel %vm1632, %v2707, %v2713
    %v2722 = vsub.f32 %v2600, %v2714
    %v2723 = vsub.f32 %v2614, %v2715
    %v2724 = vsub.f32 %v2602, %v2716
    %v2725 = vsub.f32 %v2616, %v2717
    %v2726 = vadd.f32 %v2718, 1e-05
    %v2727 = vadd.f32 %v2719, 1e-05
    %v2728 = vadd.f32 %v2720, 1e-05
    %v2729 = vadd.f32 %v2721, 1e-05
    %v2730 = vrsqrt.pop %v2726
    %v2731 = vmul.f32 %v2730, %v2726
    %v2732 = vmul.f32 %v2731, %v2730
    %v2733 = vmul.f32 0.5, %v2732
    %v2734 = vsub.f32 1.5, %v2733
    %v2735 = vmul.f32 %v2730, %v2734
    %vm2736 = vweird.f32 %v2726
    %vm2737 = vweird.f32 %v2730
    %vm2738 = vmor %vm2736, %vm2737
    %v2739 = vsel %vm2738, %v2730, %v2735
    %v2740 = vrsqrt.pop %v2727
    %v2741 = vmul.f32 %v2740, %v2727
    %v2742 = vmul.f32 %v2741, %v2740
    %v2743 = vmul.f32 0.5, %v2742
    %v2744 = vsub.f32 1.5, %v2743
    %v2745 = vmul.f32 %v2740, %v2744
    %vm2746 = vweird.f32 %v2727
    %vm2747 = vweird.f32 %v2740
    %vm2748 = vmor %vm2746, %vm2747
    %v2749 = vsel %vm2748, %v2740, %v2745
    %v2750 = vrsqrt.pop %v2728
    %v2751 = vmul.f32 %v2750, %v2728
    %v2752 = vmul.f32 %v2751, %v2750
    %v2753 = vmul.f32 0.5, %v2752
    %v2754 = vsub.f32 1.5, %v2753
    %v2755 = vmul.f32 %v2750, %v2754
    %vm2756 = vweird.f32 %v2728
    %vm2757 = vweird.f32 %v2750
    %vm2758 = vmor %vm2756, %vm2757
    %v2759 = vsel %vm2758, %v2750, %v2755
    %v2760 = vrsqrt.pop %v2729
    %v2761 = vmul.f32 %v2760, %v2729
    %v2762 = vmul.f32 %v2761, %v2760
    %v2763 = vmul.f32 0.5, %v2762
    %v2764 = vsub.f32 1.5, %v2763
    %v2765 = vmul.f32 %v2760, %v2764
    %vm2766 = vweird.f32 %v2729
    %vm2767 = vweird.f32 %v2760
    %vm2768 = vmor %vm2766, %vm2767
    %v2769 = vsel %vm2768, %v2760, %v2765
    %v2770 = vmul.f32 %v2722, %v2739
    %v2771 = vmul.f32 %v2723, %v2749
    %v2772 = vmul.f32 %v2724, %v2759
    %v2773 = vmul.f32 %v2725, %v2769
    %v2775 = vperm.slane %v2619, 0
    %v2776 = vperm.slane %v2619, 1
    %v2779 = vmul.f32 %v2770, %v2775
    %v2780 = vmul.f32 %v2771, %v2776
    %v2781 = vmul.f32 %v2772, %v2775
    %v2782 = vmul.f32 %v2773, %v2776
    %v2784 = vperm.slane %v2621, 0
    %v2785 = vperm.slane %v2621, 1
    %v2788 = vadd.f32 %v2779, %v2784
    %v2789 = vadd.f32 %v2780, %v2785
    %v2790 = vadd.f32 %v2781, %v2784
    %v2791 = vadd.f32 %v2782, %v2785
    %v2792 = vmax.f32 %v2788, 0.0
    %v2793 = vmax.f32 %v2789, 0.0
    %v2794 = vmax.f32 %v2790, 0.0
    %v2795 = vmax.f32 %v2791, 0.0
    %v2796 = vpack.c.bf16 %v2794, %v2792
    %v2797 = vpack.c.bf16 %v2795, %v2793
    %v2798 = vld [vmem:[#allocation7] sm:$0xf]
    %v2799 = vld [vmem:[#allocation7 + $0x4] sm:$0xf]
    %v2800 = vld [vmem:[#allocation7 + $0x8] sm:$0xf]
    %v2801 = vld [vmem:[#allocation7 + $0xc] sm:$0xf]
    %v2802 = vld [vmem:[#allocation7 + $0x10] sm:$0xf]
    %v2803 = vld [vmem:[#allocation7 + $0x14] sm:$0xf]
    %v2804 = vld [vmem:[#allocation7 + $0x18] sm:$0xf]
    %v2805 = vld [vmem:[#allocation7 + $0x1c] sm:$0xf]
    %v2806 = vld [vmem:[#allocation7 + $0x20] sm:$0xf]
    %v2807 = vld [vmem:[#allocation7 + $0x24] sm:$0xf]
    %v2808 = vld [vmem:[#allocation7 + $0x28] sm:$0xf]
    %v2809 = vld [vmem:[#allocation7 + $0x2c] sm:$0xf]
    %v2810 = vld [vmem:[#allocation7 + $0x30] sm:$0xf]
    %v2811 = vld [vmem:[#allocation7 + $0x34] sm:$0xf]
    %v2812 = vld [vmem:[#allocation7 + $0x38] sm:$0xf]
    %v2813 = vld [vmem:[#allocation7 + $0x3c] sm:$0xf]
    %v2814 = vld [vmem:[#allocation7 + $0x40] sm:$0xf]
    %v2815 = vld [vmem:[#allocation7 + $0x44] sm:$0xf]
    %v2816 = vld [vmem:[#allocation7 + $0x48] sm:$0xf]
    %v2817 = vld [vmem:[#allocation7 + $0x4c] sm:$0xf]
    %v2818 = vld [vmem:[#allocation7 + $0x50] sm:$0xf]
    %v2819 = vld [vmem:[#allocation7 + $0x54] sm:$0xf]
    %v2820 = vld [vmem:[#allocation7 + $0x58] sm:$0xf]
    %v2821 = vld [vmem:[#allocation7 + $0x5c] sm:$0xf]
    %v2822 = vld [vmem:[#allocation7 + $0x60] sm:$0xf]
    %v2823 = vld [vmem:[#allocation7 + $0x64] sm:$0xf]
    %v2824 = vld [vmem:[#allocation7 + $0x68] sm:$0xf]
    %v2825 = vld [vmem:[#allocation7 + $0x6c] sm:$0xf]
    %v2826 = vld [vmem:[#allocation7 + $0x70] sm:$0xf]
    %v2827 = vld [vmem:[#allocation7 + $0x74] sm:$0xf]
    %v2828 = vld [vmem:[#allocation7 + $0x78] sm:$0xf]
    %v2829 = vld [vmem:[#allocation7 + $0x7c] sm:$0xf]
    %v2830 = vld [vmem:[#allocation8 + $0x20] ss:$0 sm:$0xff]
    %v2863 = vunpack.c.l.b16 %v2798
    %v2864 = vunpack.c.l.b16 %v2799
    %v2865 = vunpack.c.l.b16 %v2800
    %v2866 = vunpack.c.l.b16 %v2801
    %v2867 = vunpack.c.l.b16 %v2802
    %v2868 = vunpack.c.l.b16 %v2803
    %v2869 = vunpack.c.l.b16 %v2804
    %v2870 = vunpack.c.l.b16 %v2805
    %v2871 = vunpack.c.l.b16 %v2806
    %v2872 = vunpack.c.l.b16 %v2807
    %v2873 = vunpack.c.l.b16 %v2808
    %v2874 = vunpack.c.l.b16 %v2809
    %v2875 = vunpack.c.l.b16 %v2810
    %v2876 = vunpack.c.l.b16 %v2811
    %v2877 = vunpack.c.l.b16 %v2812
    %v2878 = vunpack.c.l.b16 %v2813
    %v2879 = vunpack.c.l.b16 %v2814
    %v2880 = vunpack.c.l.b16 %v2815
    %v2881 = vunpack.c.l.b16 %v2816
    %v2882 = vunpack.c.l.b16 %v2817
    %v2883 = vunpack.c.l.b16 %v2818
    %v2884 = vunpack.c.l.b16 %v2819
    %v2885 = vunpack.c.l.b16 %v2820
    %v2886 = vunpack.c.l.b16 %v2821
    %v2887 = vunpack.c.l.b16 %v2822
    %v2888 = vunpack.c.l.b16 %v2823
    %v2889 = vunpack.c.l.b16 %v2824
    %v2890 = vunpack.c.l.b16 %v2825
    %v2891 = vunpack.c.l.b16 %v2826
    %v2892 = vunpack.c.l.b16 %v2827
    %v2893 = vunpack.c.l.b16 %v2828
    %v2894 = vunpack.c.l.b16 %v2829
    %v2895 = vpack.c.b16 %v2864, %v2863
    %v2896 = vpack.c.b16 %v2866, %v2865
    %v2897 = vpack.c.b16 %v2868, %v2867
    %v2898 = vpack.c.b16 %v2870, %v2869
    %v2899 = vpack.c.b16 %v2872, %v2871
    %v2900 = vpack.c.b16 %v2874, %v2873
    %v2901 = vpack.c.b16 %v2876, %v2875
    %v2902 = vpack.c.b16 %v2878, %v2877
    %v2903 = vpack.c.b16 %v2880, %v2879
    %v2904 = vpack.c.b16 %v2882, %v2881
    %v2905 = vpack.c.b16 %v2884, %v2883
    %v2906 = vpack.c.b16 %v2886, %v2885
    %v2907 = vpack.c.b16 %v2888, %v2887
    %v2908 = vpack.c.b16 %v2890, %v2889
    %v2909 = vpack.c.b16 %v2892, %v2891
    %v2910 = vpack.c.b16 %v2894, %v2893
    %2927 = vmatpush.bf16.msra.mxu0 %v2902
    %2928 = vmatpush.bf16.msra.mxu0 %v2901
    %2929 = vmatpush.bf16.msra.mxu0 %v2900
    %2930 = vmatpush.bf16.msra.mxu0 %v2899
    %2931 = vmatpush.bf16.msra.mxu0 %v2898
    %2932 = vmatpush.bf16.msra.mxu0 %v2897
    %2933 = vmatpush.bf16.msra.mxu0 %v2896
    %2934 = vmatpush.bf16.msra.mxu0 %v2895
    %2935 = vmatmul.bf16.gmra.mxu0 %v2796
    %v2936 = vpop.f32.mrf.mxu0
    %v2937 = vadd.f32 %v2830, %v2936
    %v2938 = vpop.f32.mrf.mxu0
    %v2939 = vadd.f32 %v2830, %v2938
    %2940 = vdwg.mxu0
    %2941 = vmatpush.bf16.msra.mxu0 %v2910
    %2942 = vmatpush.bf16.msra.mxu0 %v2909
    %2943 = vmatpush.bf16.msra.mxu0 %v2908
    %2944 = vmatpush.bf16.msra.mxu0 %v2907
    %2945 = vmatpush.bf16.msra.mxu0 %v2906
    %2946 = vmatpush.bf16.msra.mxu0 %v2905
    %2947 = vmatpush.bf16.msra.mxu0 %v2904
    %2948 = vmatpush.bf16.msra.mxu0 %v2903
    %2949 = vmatmul.bf16.gmra.mxu0 %v2797
    %v2950 = vpop.f32.mrf.mxu0
    %v2951 = vadd.f32 %v2937, %v2950
    %v2952 = vpop.f32.mrf.mxu0
    %v2953 = vadd.f32 %v2939, %v2952
    %2954 = vdwg.mxu0
    %v2955 = vmul.f32 %v2951, %v2484
    %v2956 = vmul.f32 %v2953, %v2482
    %2957 = vadd.xlane.f32.xlu0 %v2955
    %v2958 = vpop.xlane.xlu0 %2957
    %2959 = vadd.xlane.f32.xlu0 %v2956
    %v2960 = vpop.xlane.xlu0 %2959
    %v2961 = vmul.f32 %v2951, %v2951
    %v2962 = vmul.f32 %v2953, %v2953
    %2963 = vadd.xlane.f32.xlu0 %v2961
    %v2964 = vpop.xlane.xlu0 %2963
    %2965 = vadd.xlane.f32.xlu0 %v2962
    %v2966 = vpop.xlane.xlu0 %2965
    %v2967 = vrsqrt.pop %v2964
    %v2968 = vmul.f32 %v2967, %v2964
    %v2969 = vmul.f32 %v2968, %v2967
    %v2970 = vmul.f32 0.5, %v2969
    %v2971 = vsub.f32 1.5, %v2970
    %v2972 = vmul.f32 %v2967, %v2971
    %v2973 = vmul.f32 %v2964, %v2972
    %vm2974 = vcmp.eq.f32.partialorder %v2964, inf
    %v2975 = vsel %vm2974, %v2964, %v2973
    %vm2976 = vcmp.eq.f32.partialorder %v2964, 0.0
    %v2977 = vand.u32 %v2964, 2147483648
    %v2978 = vsel %vm2976, %v2977, %v2975
    %v2979 = vrsqrt.pop %v2966
    %v2980 = vmul.f32 %v2979, %v2966
    %v2981 = vmul.f32 %v2980, %v2979
    %v2982 = vmul.f32 0.5, %v2981
    %v2983 = vsub.f32 1.5, %v2982
    %v2984 = vmul.f32 %v2979, %v2983
    %v2985 = vmul.f32 %v2966, %v2984
    %vm2986 = vcmp.eq.f32.partialorder %v2966, inf
    %v2987 = vsel %vm2986, %v2966, %v2985
    %vm2988 = vcmp.eq.f32.partialorder %v2966, 0.0
    %v2989 = vand.u32 %v2966, 2147483648
    %v2990 = vsel %vm2988, %v2989, %v2987
    %v2991 = vmul.f32 %v2484, %v2484
    %v2992 = vmul.f32 %v2482, %v2482
    %2993 = vadd.xlane.f32.xlu0 %v2991
    %v2994 = vpop.xlane.xlu0 %2993
    %2995 = vadd.xlane.f32.xlu0 %v2992
    %v2996 = vpop.xlane.xlu0 %2995
    %v2997 = vrsqrt.pop %v2994
    %v2998 = vmul.f32 %v2997, %v2994
    %v2999 = vmul.f32 %v2998, %v2997
    %v3000 = vmul.f32 0.5, %v2999
    %v3001 = vsub.f32 1.5, %v3000
    %v3002 = vmul.f32 %v2997, %v3001
    %v3003 = vmul.f32 %v2994, %v3002
    %vm3004 = vcmp.eq.f32.partialorder %v2994, inf
    %v3005 = vsel %vm3004, %v2994, %v3003
    %vm3006 = vcmp.eq.f32.partialorder %v2994, 0.0
    %v3007 = vand.u32 %v2994, 2147483648
    %v3008 = vsel %vm3006, %v3007, %v3005
    %v3009 = vrsqrt.pop %v2996
    %v3010 = vmul.f32 %v3009, %v2996
    %v3011 = vmul.f32 %v3010, %v3009
    %v3012 = vmul.f32 0.5, %v3011
    %v3013 = vsub.f32 1.5, %v3012
    %v3014 = vmul.f32 %v3009, %v3013
    %v3015 = vmul.f32 %v2996, %v3014
    %vm3016 = vcmp.eq.f32.partialorder %v2996, inf
    %v3017 = vsel %vm3016, %v2996, %v3015
    %vm3018 = vcmp.eq.f32.partialorder %v2996, 0.0
    %v3019 = vand.u32 %v2996, 2147483648
    %v3020 = vsel %vm3018, %v3019, %v3017
    %v3021 = vmax.f32 %v2978, 1e-08
    %v3022 = vmax.f32 %v2990, 1e-08
    %v3023 = vmax.f32 %v3008, 1e-08
    %v3024 = vmax.f32 %v3020, 1e-08
    %v3025 = vmul.f32 %v3021, %v3023
    %v3026 = vmul.f32 %v3022, %v3024
    %v3027 = vrcp.pop %v3025
    %v3028 = vmul.f32 %v3025, %v3027
    %v3029 = vsub.f32 1.0, %v3028
    %v3030 = vmul.f32 %v3027, %v3029
    %v3031 = vadd.f32 %v3027, %v3030
    %vm3032 = vweird.f32 %v3025
    %vm3033 = vweird.f32 %v3027
    %vm3034 = vmor %vm3032, %vm3033
    %v3035 = vsel %vm3034, %v3027, %v3031
    %v3036 = vand.u32 2147483647, %v3025
    %vm3037 = vcmp.eq.f32.partialorder %v3036, 8.507059e+37
    %v3038 = vand.u32 %v3025, 2147483648
    %v3039 = vor.u32 1.1754944e-38, %v3038
    %v3040 = vsel %vm3037, %v3039, %v3035
    %v3041 = vmul.f32 %v2958, %v3040
    %v3042 = vrcp.pop %v3026
    %v3043 = vmul.f32 %v3026, %v3042
    %v3044 = vsub.f32 1.0, %v3043
    %v3045 = vmul.f32 %v3042, %v3044
    %v3046 = vadd.f32 %v3042, %v3045
    %vm3047 = vweird.f32 %v3026
    %vm3048 = vweird.f32 %v3042
    %vm3049 = vmor %vm3047, %vm3048
    %v3050 = vsel %vm3049, %v3042, %v3046
    %v3051 = vand.u32 2147483647, %v3026
    %vm3052 = vcmp.eq.f32.partialorder %v3051, 8.507059e+37
    %v3053 = vand.u32 %v3026, 2147483648
    %v3054 = vor.u32 1.1754944e-38, %v3053
    %v3055 = vsel %vm3052, %v3054, %v3050
    %v3056 = vmul.f32 %v2960, %v3055
    %vm3057 = vcmask 7168
    %v3058 = vsel %vm3057, %v3041, 0.0
    %v3059 = vsel %vm3057, %v3056, 0.0
    %v3060 = vadd.f32 %v3058, %v3059
    %3061 = vadd.xlane.f32.xlu0 %v3060
    %v3062 = vpop.xlane.xlu0 %3061
    %v3063 = vrot.slane %v3062, 4
    %v3064 = vadd.f32 %v3062, %v3063
    %v3065 = vrot.slane %v3064, 2
    %v3066 = vadd.f32 %v3064, %v3065
    %v3067 = vrot.slane %v3066, 1
    %v3068 = vadd.f32 %v3066, %v3067
    %s3069 = vtos %v3068
    %v3070 = vrcp.pop 16.0
    %v3071 = vmul.f32 16.0, %v3070
    %v3072 = vsub.f32 1.0, %v3071
    %v3073 = vmul.f32 %v3070, %v3072
    %v3074 = vadd.f32 %v3070, %v3073
    %vm3075 = vweird.f32 %v3070
    %v3076 = vsel %vm3075, %v3070, %v3074
    %s3077 = vtos %v3076
    %s3078 = smul.f32 %s3069, %s3077
    %s3079 = ssub.f32 0.0, %s3078
    %s3080 = scalar_lea.smem [#allocation10], 0
    %3081 = sst [smem:[%s3080]] %s3079
    // Predicated region
    $region50: #{byol_forward.1} parent=1 // pred_check
      _
    $region51: #{byol_forward.1} parent=1 // pred_check_branch
      %3083 = sbr.rel (0) target = $region53
    $region52: #{byol_forward.1} parent=1 // pred_region
      %3085 = vsyncadd [#allocation4], 0
      %s3087 = sshll.u32 %s8, 4
      %s3088 = int_to_ptr.hbm [resolvable:$true] %s3087
      %3090 = dma.smem_to_hbm [#allocation10], 16, %s3088, [#allocation4]
    $region53: #{byol_forward.1} parent=1 // pred_fallthru
      _
    // Predicated region
    $region54: #{byol_forward.1} parent=1 // pred_check
      _
    $region55: #{byol_forward.1} parent=1 // pred_check_branch
      %3092 = sbr.rel (0) target = $region57
    $region56: #{byol_forward.1} parent=1 // pred_region
      %3094 = dma.done [#allocation4], 16
    $region57: #{byol_forward.1} parent=1 // pred_fallthru
      _
    %3095 = sfence
    %3096 = vsyncpa [#allocation3], 1
    %3097 = vsyncpa [#allocation6], 1
    %3098 = vsyncpa [#allocation9], 1
    %3099 = vsyncpa [#allocation4], 1

</llo_original>
